<compile_context>
chip_gen: v7x
topology: tpu7x:2x2x1
jax: 0.10.0
libtpu: 0.0.40
codegen_flags: <defaults>
</compile_context>

<pallas_src>
import numpy as np
import jax
import jax.numpy as jnp
from jax import lax
from jax.experimental import pallas as pl
from jax.experimental.pallas import tpu as pltpu


# --------------------------------------------------------------------------
# Kernel: whole decoder, both batch samples, one grid step.
# Activations stay 2-D and lane-dense: (N*rows, W*C), lane index = x*C + c.
# --------------------------------------------------------------------------
def _decoder_kernel(x_ref, p1_ref, m1_ref, b1_ref, p2_ref, m2_ref, b2_ref,
                    p3_ref, m3_ref, b3_ref, o_ref):

    def stage(prev, p_ref, m_ref, b_ref, act):
        # prev: (N*hin, Win*Cin)
        # p_ref: (3, N*hout, N*hin)  block-diag row-upsample+pad+dy-shift
        # m_ref: (3, Win*Cin, Wout*Cout)  column-upsample+pad+dx folded weights
        acc = None
        for dy in range(3):  # static unroll; each tap is two MXU matmuls
            rows = jnp.dot(p_ref[dy], prev,
                           preferred_element_type=jnp.float32)
            part = jnp.dot(rows, m_ref[dy],
                           preferred_element_type=jnp.float32)
            acc = part if acc is None else acc + part
        y = acc + b_ref[...]
        if act == "relu":
            return jnp.maximum(y, 0.0)
        return jax.nn.sigmoid(y)                     # (N*hout, Wout*Cout)

    x0 = x_ref[...]                                  # (N*4,  4*16)
    h1 = stage(x0, p1_ref, m1_ref, b1_ref, "relu")   # (N*4,  4*16)
    h2 = stage(h1, p2_ref, m2_ref, b2_ref, "relu")   # (N*8,  8*32)
    h3 = stage(h2, p3_ref, m3_ref, b3_ref, "sigmoid")  # (N*40, 40)
    o_ref[...] = h3


# --------------------------------------------------------------------------
# pallas_call wrapper (single grid step, full-array blocks).
# --------------------------------------------------------------------------
def _full_spec(shape):
    nd = len(shape)
    return pl.BlockSpec(shape, lambda i, _nd=nd: (0,) * _nd)


def _decoder_pallas(x2d, p1, m1, b1, p2, m2, b2, p3, m3, b3):
    rows_out = p3.shape[1]                 # N * 40
    lanes_out = m3.shape[2]                # 40 * Cout(=1)
    operands = (x2d, p1, m1, b1, p2, m2, b2, p3, m3, b3)
    return pl.pallas_call(
        _decoder_kernel,
        out_shape=jax.ShapeDtypeStruct((rows_out, lanes_out), jnp.float32),
        grid=(1,),
        in_specs=[_full_spec(a.shape) for a in operands],
        out_specs=_full_spec((rows_out, lanes_out)),
        compiler_params=pltpu.CompilerParams(
            dimension_semantics=("arbitrary",)),
        cost_estimate=pl.CostEstimate(
            flops=3_500_000, transcendentals=3_200, bytes_accessed=420_000),
    )(*operands)


# --------------------------------------------------------------------------
# One-time operand preparation (outside the hot path).
# --------------------------------------------------------------------------
def _row_select_taps(hin, s, n):
    """(3, n*s*hin, n*hin) 0/1 matrices: for tap dy, block-diagonal-over-batch
    selection doing nearest row-upsample by s, zero row padding of 1, and the
    dy sublane shift — all folded into one matmul operand."""
    hout = s * hin
    p = np.zeros((3, n * hout, n * hin), np.float32)
    for dy in range(3):
        for b in range(n):
            for Y in range(hout):
                yp = Y + dy                       # padded row coordinate
                if 1 <= yp <= hout:               # else zero padding
                    p[dy, b * hout + Y, b * hin + (yp - 1) // s] = 1.0
    return jnp.asarray(p)


def _fold_conv_taps(w, b, s, win):
    """Fold column-upsample (by s), column zero-pad and the 3 dx taps into
    per-dy banded matrices M[dy]: (win*cin, s*win*cout)."""
    cin, cout = w.shape[2], w.shape[3]
    wout = s * win
    S = np.zeros((3, win, wout), np.float32)
    for dx in range(3):
        for X in range(wout):
            xp = X + dx                           # padded column coordinate
            if 1 <= xp <= wout:
                S[dx, (xp - 1) // s, X] = 1.0
    # m[dy, x_src*cin + c, X*cout + co] = sum_dx S[dx, x_src, X] * w[dy, dx, c, co]
    m = jnp.einsum("dsX,edco->escXo", jnp.asarray(S), w)
    m = m.reshape(3, win * cin, wout * cout)
    b_lane = jnp.tile(b, wout).reshape(1, wout * cout)   # lane = X*Cout + co
    return m, b_lane


def prepare_decoder_operands(params, *, n, h, w):
    """Fold weights / build row-selection matrices ONCE for a given batch/shape."""
    m1, b1 = _fold_conv_taps(*params["conv1"], s=1, win=w)
    m2, b2 = _fold_conv_taps(*params["conv2"], s=2, win=w)
    m3, b3 = _fold_conv_taps(*params["conv3"], s=5, win=2 * w)
    p1 = _row_select_taps(h, 1, n)
    p2 = _row_select_taps(h, 2, n)
    p3 = _row_select_taps(2 * h, 5, n)
    ops = (p1, m1, b1, p2, m2, b2, p3, m3, b3)
    return tuple(jax.device_put(a) for a in ops)


def init_decoder_params(key):
    """PyTorch Conv2d-style init; weights stored as (3, 3, Cin, Cout)."""
    params = {}
    specs = [("conv1", 16, 16), ("conv2", 16, 32), ("conv3", 32, 1)]
    for name, cin, cout in specs:
        key, kw, kb = jax.random.split(key, 3)
        bound = 1.0 / jnp.sqrt(cin * 3 * 3)
        wgt = jax.random.uniform(kw, (3, 3, cin, cout), jnp.float32, -bound, bound)
        bias = jax.random.uniform(kb, (cout,), jnp.float32, -bound, bound)
        params[name] = (wgt, bias)
    return params


@jax.jit
def decoder_forward(x_nchw, ops):
    """Input NCHW (N,16,H,W) + prefolded operands -> output NCHW (N,1,10H,10W)."""
    n, c, h, w = x_nchw.shape
    # (N*H, W*C), lane = x*C + c; batch stacked on the sublane axis.
    x2d = jnp.transpose(x_nchw, (0, 2, 3, 1)).reshape(n * h, w * c)
    y = _decoder_pallas(x2d, *ops)                  # (N*10H, 10W)
    return y.reshape(n, 1, 10 * h, 10 * w)          # free metadata reshape


# --------------------------------------------------------------------------
# Pure-JAX reference (lax.conv) for the correctness check
# --------------------------------------------------------------------------
def _reference_forward(x_nchw, params):
    def conv(x, w, b):
        w_oihw = jnp.transpose(w, (3, 2, 0, 1))
        y = lax.conv_general_dilated(
            x, w_oihw, window_strides=(1, 1), padding="SAME",
            dimension_numbers=("NCHW", "OIHW", "NCHW"))
        return y + b.reshape(1, -1, 1, 1)

    w1, b1 = params["conv1"]
    w2, b2 = params["conv2"]
    w3, b3 = params["conv3"]
    x = jax.nn.relu(conv(x_nchw, w1, b1))
    x = jnp.repeat(jnp.repeat(x, 2, axis=2), 2, axis=3)
    x = jax.nn.relu(conv(x, w2, b2))
    x = jnp.repeat(jnp.repeat(x, 5, axis=2), 5, axis=3)
    x = jax.nn.sigmoid(conv(x, w3, b3))
    return x


if __name__ == "__main__":
    key = jax.random.PRNGKey(0)
    k_params, k_x = jax.random.split(key)

    params = init_decoder_params(k_params)
    # decoder latent: batch=2, 16 channels, 4x4 spatial -> (2, 1, 40, 40)
    x = jax.random.normal(k_x, (2, 16, 4, 4), jnp.float32)

    # One-time folding (not in the per-forward hot path).
    ops = prepare_decoder_operands(params, n=2, h=4, w=4)

    out = jax.block_until_ready(decoder_forward(x, ops))
    assert out.shape == (2, 1, 40, 40), out.shape

    ref = jax.block_until_ready(_reference_forward(x, params))
    max_err = float(jnp.max(jnp.abs(out - ref)))
    assert jnp.allclose(out, ref, atol=5e-5, rtol=5e-5), max_err

    print("KERNEL_OK")
</pallas_src>

<mosaic_0001>
module attributes {stable_mosaic.version = 11 : i64} {
  func.func @_decoder_kernel(%arg0: i32, %arg1: memref<8x64xf32, #tpu.memory_space<vmem>>, %arg2: memref<3x8x8xf32, #tpu.memory_space<vmem>>, %arg3: memref<3x64x64xf32, #tpu.memory_space<vmem>>, %arg4: memref<1x64xf32, #tpu.memory_space<vmem>>, %arg5: memref<3x16x8xf32, #tpu.memory_space<vmem>>, %arg6: memref<3x64x256xf32, #tpu.memory_space<vmem>>, %arg7: memref<1x256xf32, #tpu.memory_space<vmem>>, %arg8: memref<3x80x16xf32, #tpu.memory_space<vmem>>, %arg9: memref<3x256x40xf32, #tpu.memory_space<vmem>>, %arg10: memref<1x40xf32, #tpu.memory_space<vmem>>, %arg11: memref<80x40xf32, #tpu.memory_space<vmem>>) attributes {dimension_semantics = [#tpu.dimension_semantics<arbitrary>], iteration_bounds = array<i64: 1>, scalar_prefetch = 0 : i64, scratch_operands = 0 : i64, tpu.core_type = #tpu.core_type<tc>, window_params = [{pipeline_mode = #tpu.pipeline_mode<synchronous>, transform_indices = @transform_0, window_bounds = array<i64: 8, 64>}, {pipeline_mode = #tpu.pipeline_mode<synchronous>, transform_indices = @transform_1, window_bounds = array<i64: 3, 8, 8>}, {pipeline_mode = #tpu.pipeline_mode<synchronous>, transform_indices = @transform_2, window_bounds = array<i64: 3, 64, 64>}, {pipeline_mode = #tpu.pipeline_mode<synchronous>, transform_indices = @transform_3, window_bounds = array<i64: 1, 64>}, {pipeline_mode = #tpu.pipeline_mode<synchronous>, transform_indices = @transform_4, window_bounds = array<i64: 3, 16, 8>}, {pipeline_mode = #tpu.pipeline_mode<synchronous>, transform_indices = @transform_5, window_bounds = array<i64: 3, 64, 256>}, {pipeline_mode = #tpu.pipeline_mode<synchronous>, transform_indices = @transform_6, window_bounds = array<i64: 1, 256>}, {pipeline_mode = #tpu.pipeline_mode<synchronous>, transform_indices = @transform_7, window_bounds = array<i64: 3, 80, 16>}, {pipeline_mode = #tpu.pipeline_mode<synchronous>, transform_indices = @transform_8, window_bounds = array<i64: 3, 256, 40>}, {pipeline_mode = #tpu.pipeline_mode<synchronous>, transform_indices = @transform_9, window_bounds = array<i64: 1, 40>}, {pipeline_mode = #tpu.pipeline_mode<synchronous>, transform_indices = @transform_10, window_bounds = array<i64: 80, 40>}]} {
    %c0 = arith.constant 0 : index
    %c0_0 = arith.constant 0 : index
    %0 = vector.load %arg1[%c0, %c0_0] : memref<8x64xf32, #tpu.memory_space<vmem>>, vector<8x64xf32>
    %c0_1 = arith.constant 0 : index
    %c0_2 = arith.constant 0 : index
    %c0_3 = arith.constant 0 : index
    %1 = vector.load %arg2[%c0_1, %c0_2, %c0_3] : memref<3x8x8xf32, #tpu.memory_space<vmem>>, vector<1x8x8xf32>
    %2 = vector.shape_cast %1 : vector<1x8x8xf32> to vector<8x8xf32>
    %cst = arith.constant dense<0.000000e+00> : vector<8x64xf32>
    %3 = tpu.matmul %2, %0, %cst {dimension_numbers = #tpu.dot_dimension_numbers<[1], [0], [0], [1], [0, 0, 1, 1], [], []>} : vector<8x8xf32>, vector<8x64xf32>, vector<8x64xf32> -> vector<8x64xf32>
    %c0_4 = arith.constant 0 : index
    %c0_5 = arith.constant 0 : index
    %c0_6 = arith.constant 0 : index
    %4 = vector.load %arg3[%c0_4, %c0_5, %c0_6] : memref<3x64x64xf32, #tpu.memory_space<vmem>>, vector<1x64x64xf32>
    %5 = vector.shape_cast %4 : vector<1x64x64xf32> to vector<64x64xf32>
    %cst_7 = arith.constant dense<0.000000e+00> : vector<8x64xf32>
    %6 = tpu.matmul %3, %5, %cst_7 {dimension_numbers = #tpu.dot_dimension_numbers<[1], [0], [0], [1], [0, 0, 1, 1], [], []>} : vector<8x64xf32>, vector<64x64xf32>, vector<8x64xf32> -> vector<8x64xf32>
    %c1 = arith.constant 1 : index
    %c0_8 = arith.constant 0 : index
    %c0_9 = arith.constant 0 : index
    %7 = vector.load %arg2[%c1, %c0_8, %c0_9] : memref<3x8x8xf32, #tpu.memory_space<vmem>>, vector<1x8x8xf32>
    %8 = vector.shape_cast %7 : vector<1x8x8xf32> to vector<8x8xf32>
    %cst_10 = arith.constant dense<0.000000e+00> : vector<8x64xf32>
    %9 = tpu.matmul %8, %0, %cst_10 {dimension_numbers = #tpu.dot_dimension_numbers<[1], [0], [0], [1], [0, 0, 1, 1], [], []>} : vector<8x8xf32>, vector<8x64xf32>, vector<8x64xf32> -> vector<8x64xf32>
    %c1_11 = arith.constant 1 : index
    %c0_12 = arith.constant 0 : index
    %c0_13 = arith.constant 0 : index
    %10 = vector.load %arg3[%c1_11, %c0_12, %c0_13] : memref<3x64x64xf32, #tpu.memory_space<vmem>>, vector<1x64x64xf32>
    %11 = vector.shape_cast %10 : vector<1x64x64xf32> to vector<64x64xf32>
    %cst_14 = arith.constant dense<0.000000e+00> : vector<8x64xf32>
    %12 = tpu.matmul %9, %11, %cst_14 {dimension_numbers = #tpu.dot_dimension_numbers<[1], [0], [0], [1], [0, 0, 1, 1], [], []>} : vector<8x64xf32>, vector<64x64xf32>, vector<8x64xf32> -> vector<8x64xf32>
    %13 = arith.addf %6, %12 : vector<8x64xf32>
    %c2 = arith.constant 2 : index
    %c0_15 = arith.constant 0 : index
    %c0_16 = arith.constant 0 : index
    %14 = vector.load %arg2[%c2, %c0_15, %c0_16] : memref<3x8x8xf32, #tpu.memory_space<vmem>>, vector<1x8x8xf32>
    %15 = vector.shape_cast %14 : vector<1x8x8xf32> to vector<8x8xf32>
    %cst_17 = arith.constant dense<0.000000e+00> : vector<8x64xf32>
    %16 = tpu.matmul %15, %0, %cst_17 {dimension_numbers = #tpu.dot_dimension_numbers<[1], [0], [0], [1], [0, 0, 1, 1], [], []>} : vector<8x8xf32>, vector<8x64xf32>, vector<8x64xf32> -> vector<8x64xf32>
    %c2_18 = arith.constant 2 : index
    %c0_19 = arith.constant 0 : index
    %c0_20 = arith.constant 0 : index
    %17 = vector.load %arg3[%c2_18, %c0_19, %c0_20] : memref<3x64x64xf32, #tpu.memory_space<vmem>>, vector<1x64x64xf32>
    %18 = vector.shape_cast %17 : vector<1x64x64xf32> to vector<64x64xf32>
    %cst_21 = arith.constant dense<0.000000e+00> : vector<8x64xf32>
    %19 = tpu.matmul %16, %18, %cst_21 {dimension_numbers = #tpu.dot_dimension_numbers<[1], [0], [0], [1], [0, 0, 1, 1], [], []>} : vector<8x64xf32>, vector<64x64xf32>, vector<8x64xf32> -> vector<8x64xf32>
    %20 = arith.addf %13, %19 : vector<8x64xf32>
    %c0_22 = arith.constant 0 : index
    %c0_23 = arith.constant 0 : index
    %21 = vector.load %arg4[%c0_22, %c0_23] : memref<1x64xf32, #tpu.memory_space<vmem>>, vector<1x64xf32>
    %22 = vector.broadcast %21 : vector<1x64xf32> to vector<8x64xf32>
    %23 = arith.addf %20, %22 : vector<8x64xf32>
    %cst_24 = arith.constant 0.000000e+00 : f32
    %24 = vector.broadcast %cst_24 : f32 to vector<8x64xf32>
    %25 = arith.maximumf %23, %24 : vector<8x64xf32>
    %c0_25 = arith.constant 0 : index
    %c0_26 = arith.constant 0 : index
    %c0_27 = arith.constant 0 : index
    %26 = vector.load %arg5[%c0_25, %c0_26, %c0_27] : memref<3x16x8xf32, #tpu.memory_space<vmem>>, vector<1x16x8xf32>
    %27 = vector.shape_cast %26 : vector<1x16x8xf32> to vector<16x8xf32>
    %cst_28 = arith.constant dense<0.000000e+00> : vector<16x64xf32>
    %28 = tpu.matmul %27, %25, %cst_28 {dimension_numbers = #tpu.dot_dimension_numbers<[1], [0], [0], [1], [0, 0, 1, 1], [], []>} : vector<16x8xf32>, vector<8x64xf32>, vector<16x64xf32> -> vector<16x64xf32>
    %c0_29 = arith.constant 0 : index
    %c0_30 = arith.constant 0 : index
    %c0_31 = arith.constant 0 : index
    %29 = vector.load %arg6[%c0_29, %c0_30, %c0_31] : memref<3x64x256xf32, #tpu.memory_space<vmem>>, vector<1x64x256xf32>
    %30 = vector.shape_cast %29 : vector<1x64x256xf32> to vector<64x256xf32>
    %cst_32 = arith.constant dense<0.000000e+00> : vector<16x256xf32>
    %31 = tpu.matmul %28, %30, %cst_32 {dimension_numbers = #tpu.dot_dimension_numbers<[1], [0], [0], [1], [0, 0, 1, 1], [], []>} : vector<16x64xf32>, vector<64x256xf32>, vector<16x256xf32> -> vector<16x256xf32>
    %c1_33 = arith.constant 1 : index
    %c0_34 = arith.constant 0 : index
    %c0_35 = arith.constant 0 : index
    %32 = vector.load %arg5[%c1_33, %c0_34, %c0_35] : memref<3x16x8xf32, #tpu.memory_space<vmem>>, vector<1x16x8xf32>
    %33 = vector.shape_cast %32 : vector<1x16x8xf32> to vector<16x8xf32>
    %cst_36 = arith.constant dense<0.000000e+00> : vector<16x64xf32>
    %34 = tpu.matmul %33, %25, %cst_36 {dimension_numbers = #tpu.dot_dimension_numbers<[1], [0], [0], [1], [0, 0, 1, 1], [], []>} : vector<16x8xf32>, vector<8x64xf32>, vector<16x64xf32> -> vector<16x64xf32>
    %c1_37 = arith.constant 1 : index
    %c0_38 = arith.constant 0 : index
    %c0_39 = arith.constant 0 : index
    %35 = vector.load %arg6[%c1_37, %c0_38, %c0_39] : memref<3x64x256xf32, #tpu.memory_space<vmem>>, vector<1x64x256xf32>
    %36 = vector.shape_cast %35 : vector<1x64x256xf32> to vector<64x256xf32>
    %cst_40 = arith.constant dense<0.000000e+00> : vector<16x256xf32>
    %37 = tpu.matmul %34, %36, %cst_40 {dimension_numbers = #tpu.dot_dimension_numbers<[1], [0], [0], [1], [0, 0, 1, 1], [], []>} : vector<16x64xf32>, vector<64x256xf32>, vector<16x256xf32> -> vector<16x256xf32>
    %38 = arith.addf %31, %37 : vector<16x256xf32>
    %c2_41 = arith.constant 2 : index
    %c0_42 = arith.constant 0 : index
    %c0_43 = arith.constant 0 : index
    %39 = vector.load %arg5[%c2_41, %c0_42, %c0_43] : memref<3x16x8xf32, #tpu.memory_space<vmem>>, vector<1x16x8xf32>
    %40 = vector.shape_cast %39 : vector<1x16x8xf32> to vector<16x8xf32>
    %cst_44 = arith.constant dense<0.000000e+00> : vector<16x64xf32>
    %41 = tpu.matmul %40, %25, %cst_44 {dimension_numbers = #tpu.dot_dimension_numbers<[1], [0], [0], [1], [0, 0, 1, 1], [], []>} : vector<16x8xf32>, vector<8x64xf32>, vector<16x64xf32> -> vector<16x64xf32>
    %c2_45 = arith.constant 2 : index
    %c0_46 = arith.constant 0 : index
    %c0_47 = arith.constant 0 : index
    %42 = vector.load %arg6[%c2_45, %c0_46, %c0_47] : memref<3x64x256xf32, #tpu.memory_space<vmem>>, vector<1x64x256xf32>
    %43 = vector.shape_cast %42 : vector<1x64x256xf32> to vector<64x256xf32>
    %cst_48 = arith.constant dense<0.000000e+00> : vector<16x256xf32>
    %44 = tpu.matmul %41, %43, %cst_48 {dimension_numbers = #tpu.dot_dimension_numbers<[1], [0], [0], [1], [0, 0, 1, 1], [], []>} : vector<16x64xf32>, vector<64x256xf32>, vector<16x256xf32> -> vector<16x256xf32>
    %45 = arith.addf %38, %44 : vector<16x256xf32>
    %c0_49 = arith.constant 0 : index
    %c0_50 = arith.constant 0 : index
    %46 = vector.load %arg7[%c0_49, %c0_50] : memref<1x256xf32, #tpu.memory_space<vmem>>, vector<1x256xf32>
    %47 = vector.broadcast %46 : vector<1x256xf32> to vector<16x256xf32>
    %48 = arith.addf %45, %47 : vector<16x256xf32>
    %cst_51 = arith.constant 0.000000e+00 : f32
    %49 = vector.broadcast %cst_51 : f32 to vector<16x256xf32>
    %50 = arith.maximumf %48, %49 : vector<16x256xf32>
    %c0_52 = arith.constant 0 : index
    %c0_53 = arith.constant 0 : index
    %c0_54 = arith.constant 0 : index
    %51 = vector.load %arg8[%c0_52, %c0_53, %c0_54] : memref<3x80x16xf32, #tpu.memory_space<vmem>>, vector<1x80x16xf32>
    %52 = vector.shape_cast %51 : vector<1x80x16xf32> to vector<80x16xf32>
    %cst_55 = arith.constant dense<0.000000e+00> : vector<80x256xf32>
    %53 = tpu.matmul %52, %50, %cst_55 {dimension_numbers = #tpu.dot_dimension_numbers<[1], [0], [0], [1], [0, 0, 1, 1], [], []>} : vector<80x16xf32>, vector<16x256xf32>, vector<80x256xf32> -> vector<80x256xf32>
    %c0_56 = arith.constant 0 : index
    %c0_57 = arith.constant 0 : index
    %c0_58 = arith.constant 0 : index
    %54 = vector.load %arg9[%c0_56, %c0_57, %c0_58] : memref<3x256x40xf32, #tpu.memory_space<vmem>>, vector<1x256x40xf32>
    %55 = vector.shape_cast %54 : vector<1x256x40xf32> to vector<256x40xf32>
    %cst_59 = arith.constant dense<0.000000e+00> : vector<80x40xf32>
    %56 = tpu.matmul %53, %55, %cst_59 {dimension_numbers = #tpu.dot_dimension_numbers<[1], [0], [0], [1], [0, 0, 1, 1], [], []>} : vector<80x256xf32>, vector<256x40xf32>, vector<80x40xf32> -> vector<80x40xf32>
    %c1_60 = arith.constant 1 : index
    %c0_61 = arith.constant 0 : index
    %c0_62 = arith.constant 0 : index
    %57 = vector.load %arg8[%c1_60, %c0_61, %c0_62] : memref<3x80x16xf32, #tpu.memory_space<vmem>>, vector<1x80x16xf32>
    %58 = vector.shape_cast %57 : vector<1x80x16xf32> to vector<80x16xf32>
    %cst_63 = arith.constant dense<0.000000e+00> : vector<80x256xf32>
    %59 = tpu.matmul %58, %50, %cst_63 {dimension_numbers = #tpu.dot_dimension_numbers<[1], [0], [0], [1], [0, 0, 1, 1], [], []>} : vector<80x16xf32>, vector<16x256xf32>, vector<80x256xf32> -> vector<80x256xf32>
    %c1_64 = arith.constant 1 : index
    %c0_65 = arith.constant 0 : index
    %c0_66 = arith.constant 0 : index
    %60 = vector.load %arg9[%c1_64, %c0_65, %c0_66] : memref<3x256x40xf32, #tpu.memory_space<vmem>>, vector<1x256x40xf32>
    %61 = vector.shape_cast %60 : vector<1x256x40xf32> to vector<256x40xf32>
    %cst_67 = arith.constant dense<0.000000e+00> : vector<80x40xf32>
    %62 = tpu.matmul %59, %61, %cst_67 {dimension_numbers = #tpu.dot_dimension_numbers<[1], [0], [0], [1], [0, 0, 1, 1], [], []>} : vector<80x256xf32>, vector<256x40xf32>, vector<80x40xf32> -> vector<80x40xf32>
    %63 = arith.addf %56, %62 : vector<80x40xf32>
    %c2_68 = arith.constant 2 : index
    %c0_69 = arith.constant 0 : index
    %c0_70 = arith.constant 0 : index
    %64 = vector.load %arg8[%c2_68, %c0_69, %c0_70] : memref<3x80x16xf32, #tpu.memory_space<vmem>>, vector<1x80x16xf32>
    %65 = vector.shape_cast %64 : vector<1x80x16xf32> to vector<80x16xf32>
    %cst_71 = arith.constant dense<0.000000e+00> : vector<80x256xf32>
    %66 = tpu.matmul %65, %50, %cst_71 {dimension_numbers = #tpu.dot_dimension_numbers<[1], [0], [0], [1], [0, 0, 1, 1], [], []>} : vector<80x16xf32>, vector<16x256xf32>, vector<80x256xf32> -> vector<80x256xf32>
    %c2_72 = arith.constant 2 : index
    %c0_73 = arith.constant 0 : index
    %c0_74 = arith.constant 0 : index
    %67 = vector.load %arg9[%c2_72, %c0_73, %c0_74] : memref<3x256x40xf32, #tpu.memory_space<vmem>>, vector<1x256x40xf32>
    %68 = vector.shape_cast %67 : vector<1x256x40xf32> to vector<256x40xf32>
    %cst_75 = arith.constant dense<0.000000e+00> : vector<80x40xf32>
    %69 = tpu.matmul %66, %68, %cst_75 {dimension_numbers = #tpu.dot_dimension_numbers<[1], [0], [0], [1], [0, 0, 1, 1], [], []>} : vector<80x256xf32>, vector<256x40xf32>, vector<80x40xf32> -> vector<80x40xf32>
    %70 = arith.addf %63, %69 : vector<80x40xf32>
    %c0_76 = arith.constant 0 : index
    %c0_77 = arith.constant 0 : index
    %71 = vector.load %arg10[%c0_76, %c0_77] : memref<1x40xf32, #tpu.memory_space<vmem>>, vector<1x40xf32>
    %72 = vector.broadcast %71 : vector<1x40xf32> to vector<80x40xf32>
    %73 = arith.addf %70, %72 : vector<80x40xf32>
    %74 = arith.negf %73 : vector<80x40xf32>
    %75 = math.exp %74 : vector<80x40xf32>
    %cst_78 = arith.constant 1.000000e+00 : f32
    %76 = vector.broadcast %cst_78 : f32 to vector<80x40xf32>
    %77 = arith.addf %76, %75 : vector<80x40xf32>
    %78 = arith.divf %76, %77 : vector<80x40xf32>
    %c0_79 = arith.constant 0 : index
    %c0_80 = arith.constant 0 : index
    %79 = vector.load %arg11[%c0_79, %c0_80] : memref<80x40xf32, #tpu.memory_space<vmem>>, vector<80x40xf32>
    tpu.vector_store %arg11[%c0_79, %c0_80], %78 {strides = array<i32>} : memref<80x40xf32, #tpu.memory_space<vmem>>, vector<80x40xf32>,
    return
  }
  func.func @transform_0(%arg0: i32) -> (i32, i32) {
    %c0_i32 = arith.constant 0 : i32
    %c0_i32_0 = arith.constant 0 : i32
    %c0_i32_1 = arith.constant 0 : i32
    return %c0_i32, %c0_i32_0 : i32, i32
  }
  func.func @transform_1(%arg0: i32) -> (i32, i32, i32) {
    %c0_i32 = arith.constant 0 : i32
    %c0_i32_0 = arith.constant 0 : i32
    %c0_i32_1 = arith.constant 0 : i32
    %c0_i32_2 = arith.constant 0 : i32
    return %c0_i32, %c0_i32_0, %c0_i32_1 : i32, i32, i32
  }
  func.func @transform_2(%arg0: i32) -> (i32, i32, i32) {
    %c0_i32 = arith.constant 0 : i32
    %c0_i32_0 = arith.constant 0 : i32
    %c0_i32_1 = arith.constant 0 : i32
    %c0_i32_2 = arith.constant 0 : i32
    return %c0_i32, %c0_i32_0, %c0_i32_1 : i32, i32, i32
  }
  func.func @transform_3(%arg0: i32) -> (i32, i32) {
    %c0_i32 = arith.constant 0 : i32
    %c0_i32_0 = arith.constant 0 : i32
    %c0_i32_1 = arith.constant 0 : i32
    return %c0_i32, %c0_i32_0 : i32, i32
  }
  func.func @transform_4(%arg0: i32) -> (i32, i32, i32) {
    %c0_i32 = arith.constant 0 : i32
    %c0_i32_0 = arith.constant 0 : i32
    %c0_i32_1 = arith.constant 0 : i32
    %c0_i32_2 = arith.constant 0 : i32
    return %c0_i32, %c0_i32_0, %c0_i32_1 : i32, i32, i32
  }
  func.func @transform_5(%arg0: i32) -> (i32, i32, i32) {
    %c0_i32 = arith.constant 0 : i32
    %c0_i32_0 = arith.constant 0 : i32
    %c0_i32_1 = arith.constant 0 : i32
    %c0_i32_2 = arith.constant 0 : i32
    return %c0_i32, %c0_i32_0, %c0_i32_1 : i32, i32, i32
  }
  func.func @transform_6(%arg0: i32) -> (i32, i32) {
    %c0_i32 = arith.constant 0 : i32
    %c0_i32_0 = arith.constant 0 : i32
    %c0_i32_1 = arith.constant 0 : i32
    return %c0_i32, %c0_i32_0 : i32, i32
  }
  func.func @transform_7(%arg0: i32) -> (i32, i32, i32) {
    %c0_i32 = arith.constant 0 : i32
    %c0_i32_0 = arith.constant 0 : i32
    %c0_i32_1 = arith.constant 0 : i32
    %c0_i32_2 = arith.constant 0 : i32
    return %c0_i32, %c0_i32_0, %c0_i32_1 : i32, i32, i32
  }
  func.func @transform_8(%arg0: i32) -> (i32, i32, i32) {
    %c0_i32 = arith.constant 0 : i32
    %c0_i32_0 = arith.constant 0 : i32
    %c0_i32_1 = arith.constant 0 : i32
    %c0_i32_2 = arith.constant 0 : i32
    return %c0_i32, %c0_i32_0, %c0_i32_1 : i32, i32, i32
  }
  func.func @transform_9(%arg0: i32) -> (i32, i32) {
    %c0_i32 = arith.constant 0 : i32
    %c0_i32_0 = arith.constant 0 : i32
    %c0_i32_1 = arith.constant 0 : i32
    return %c0_i32, %c0_i32_0 : i32, i32
  }
  func.func @transform_10(%arg0: i32) -> (i32, i32) {
    %c0_i32 = arith.constant 0 : i32
    %c0_i32_0 = arith.constant 0 : i32
    %c0_i32_1 = arith.constant 0 : i32
    return %c0_i32, %c0_i32_0 : i32, i32
  }
}

</mosaic_0001>

<llo_original>
// kernel: decoder_forward.1
$region0: #{decoder_forward.1}
  #allocation0 [shape = 'u32[]', space=smem, size = 0x4, offset = 0x4, fixed_abs, tag = 'smem constant byte address 0x4 - core index']
  #allocation1 [shape = 'u32[144,128]{1,0:T(1,128)}', space=vmem, size = 0x12000, scoped, tag = 'internal scratch']
  %s0 = inlined_call_operand.vmem [shape: f32[8,64], index: 0, kind: input, shape index: {}]
  %s1 = inlined_call_operand.vmem [shape: f32[3,8,8], index: 1, kind: input, shape index: {}]
  %s2 = inlined_call_operand.vmem [shape: f32[3,64,64], index: 2, kind: input, shape index: {}]
  %s3 = inlined_call_operand.vmem [shape: f32[1,64], index: 3, kind: input, shape index: {}]
  %s4 = inlined_call_operand.vmem [shape: f32[3,16,8], index: 4, kind: input, shape index: {}]
  %s5 = inlined_call_operand.vmem [shape: f32[3,64,256], index: 5, kind: input, shape index: {}]
  %s6 = inlined_call_operand.vmem [shape: f32[1,256], index: 6, kind: input, shape index: {}]
  %s7 = inlined_call_operand.vmem [shape: f32[3,80,16], index: 7, kind: input, shape index: {}]
  %s8 = inlined_call_operand.vmem [shape: f32[3,256,40], index: 8, kind: input, shape index: {}]
  %s9 = inlined_call_operand.vmem [shape: f32[1,40], index: 9, kind: input, shape index: {}]
  %s10 = inlined_call_operand.hbm [shape: f32[80,40], index: 10, kind: output, shape index: {}]
  %s11 = sld [smem:[#allocation0]]
  $region50: #{decoder_forward.1} parent=0
    _
  %s13 = ssub.s32 1, %s11
  %s14 = scalar_select 0, %s13, %s11
  $region1: #{decoder_forward.1} parent=0
    #allocation2 [shape = 'u8[40960]{0}', space=vmem, size = 0xa000, scoped, tag = 'output window, operand 0, single buffered']
    #allocation3 [shape = 's32[1]{0}', space=sflag, size = 0x4, scoped, tag = 'scoped memory for decoder_forward.1']
    %15 = vsyncpa [#allocation3], 0
    // Predicated region
    $region2: #{decoder_forward.1} parent=1 // pred_check
      _
    $region3: #{decoder_forward.1} parent=1 // pred_check_branch
      %17 = sbr.rel (0) target = $region5
    $region4: #{decoder_forward.1} parent=1 // pred_region
      _
    $region5: #{decoder_forward.1} parent=1 // pred_fallthru
      _
    // Predicated region
    $region6: #{decoder_forward.1} parent=1 // pred_check
      _
    $region7: #{decoder_forward.1} parent=1 // pred_check_branch
      %19 = sbr.rel (0) target = $region9
    $region8: #{decoder_forward.1} parent=1 // pred_region
      _
    $region9: #{decoder_forward.1} parent=1 // pred_fallthru
      _
    // Predicated region
    $region10: #{decoder_forward.1} parent=1 // pred_check
      _
    $region11: #{decoder_forward.1} parent=1 // pred_check_branch
      %21 = sbr.rel (0) target = $region13
    $region12: #{decoder_forward.1} parent=1 // pred_region
      _
    $region13: #{decoder_forward.1} parent=1 // pred_fallthru
      _
    // Predicated region
    $region14: #{decoder_forward.1} parent=1 // pred_check
      _
    $region15: #{decoder_forward.1} parent=1 // pred_check_branch
      %23 = sbr.rel (0) target = $region17
    $region16: #{decoder_forward.1} parent=1 // pred_region
      _
    $region17: #{decoder_forward.1} parent=1 // pred_fallthru
      _
    // Predicated region
    $region18: #{decoder_forward.1} parent=1 // pred_check
      _
    $region19: #{decoder_forward.1} parent=1 // pred_check_branch
      %25 = sbr.rel (0) target = $region21
    $region20: #{decoder_forward.1} parent=1 // pred_region
      _
    $region21: #{decoder_forward.1} parent=1 // pred_fallthru
      _
    // Predicated region
    $region22: #{decoder_forward.1} parent=1 // pred_check
      _
    $region23: #{decoder_forward.1} parent=1 // pred_check_branch
      %27 = sbr.rel (0) target = $region25
    $region24: #{decoder_forward.1} parent=1 // pred_region
      _
    $region25: #{decoder_forward.1} parent=1 // pred_fallthru
      _
    // Predicated region
    $region26: #{decoder_forward.1} parent=1 // pred_check
      _
    $region27: #{decoder_forward.1} parent=1 // pred_check_branch
      %29 = sbr.rel (0) target = $region29
    $region28: #{decoder_forward.1} parent=1 // pred_region
      _
    $region29: #{decoder_forward.1} parent=1 // pred_fallthru
      _
    // Predicated region
    $region30: #{decoder_forward.1} parent=1 // pred_check
      _
    $region31: #{decoder_forward.1} parent=1 // pred_check_branch
      %31 = sbr.rel (0) target = $region33
    $region32: #{decoder_forward.1} parent=1 // pred_region
      _
    $region33: #{decoder_forward.1} parent=1 // pred_fallthru
      _
    // Predicated region
    $region34: #{decoder_forward.1} parent=1 // pred_check
      _
    $region35: #{decoder_forward.1} parent=1 // pred_check_branch
      %33 = sbr.rel (0) target = $region37
    $region36: #{decoder_forward.1} parent=1 // pred_region
      _
    $region37: #{decoder_forward.1} parent=1 // pred_fallthru
      _
    // Predicated region
    $region38: #{decoder_forward.1} parent=1 // pred_check
      _
    $region39: #{decoder_forward.1} parent=1 // pred_check_branch
      %35 = sbr.rel (0) target = $region41
    $region40: #{decoder_forward.1} parent=1 // pred_region
      _
    $region41: #{decoder_forward.1} parent=1 // pred_fallthru
      _
    %v36 = vld [vmem:[%s0] sm:$0xff]
    %v37 = vld [vmem:[%s1] sm:$0xff]
    %vm38 = vcmask 64512
    %v40 = vsel %vm38, %v37, 0
    %42 = vmatprep.subr.mxu0 0.0
    %43 = vmatpush1.msra.mxu0 %v36
    %44 = vmatprep.subr.mxu0 0.0
    %45 = vmatpush1.msra.mxu0 0.0
    %46 = vmatprep.subr.mxu0 0.0
    %47 = vmatpush1.msra.mxu0 0.0
    %48 = vmatprep.subr.mxu0 0.0
    %49 = vmatpush1.msra.mxu0 0.0
    %50 = vmatprep.subr.mxu0 0.0
    %51 = vmatpush1.msra.mxu0 0.0
    %52 = vmatprep.subr.mxu0 0.0
    %53 = vmatpush1.msra.mxu0 0.0
    %54 = vmatprep.subr.mxu0 0.0
    %55 = vmatpush1.msra.mxu0 0.0
    %56 = vmatprep.subr.mxu0 0.0
    %57 = vmatpush1.msra.mxu0 0.0
    %58 = vmatprep.subr.mxu0 0.0
    %59 = vmatpush1.msra.mxu0 0.0
    %60 = vmatprep.subr.mxu0 0.0
    %61 = vmatpush1.msra.mxu0 0.0
    %62 = vmatprep.subr.mxu0 0.0
    %63 = vmatpush1.msra.mxu0 0.0
    %64 = vmatprep.subr.mxu0 0.0
    %65 = vmatpush1.msra.mxu0 0.0
    %66 = vmatprep.subr.mxu0 0.0
    %67 = vmatpush1.msra.mxu0 0.0
    %68 = vmatprep.subr.mxu0 0.0
    %69 = vmatpush1.msra.mxu0 0.0
    %70 = vmatprep.subr.mxu0 0.0
    %71 = vmatpush1.msra.mxu0 0.0
    %72 = vmatprep.subr.mxu0 0.0
    %73 = vmatpush1.msra.mxu0 0.0
    %74 = vmatprep.subr.mxu0 0.0
    %75 = vmatpush1.msra.mxu0 0.0
    %76 = vmatprep.subr.mxu0 0.0
    %77 = vmatpush1.msra.mxu0 0.0
    %78 = vmatprep.subr.mxu0 0.0
    %79 = vmatpush1.msra.mxu0 0.0
    %80 = vmatprep.subr.mxu0 0.0
    %81 = vmatpush1.msra.mxu0 0.0
    %82 = vmatprep.subr.mxu0 0.0
    %83 = vmatpush1.msra.mxu0 0.0
    %84 = vmatprep.subr.mxu0 0.0
    %85 = vmatpush1.msra.mxu0 0.0
    %86 = vmatprep.subr.mxu0 0.0
    %87 = vmatpush1.msra.mxu0 0.0
    %88 = vmatprep.subr.mxu0 0.0
    %89 = vmatpush1.msra.mxu0 0.0
    %90 = vmatprep.subr.mxu0 0.0
    %91 = vmatpush1.msra.mxu0 0.0
    %92 = vmatprep.subr.mxu0 0.0
    %93 = vmatpush1.msra.mxu0 0.0
    %94 = vmatprep.subr.mxu0 0.0
    %95 = vmatpush1.msra.mxu0 0.0
    %96 = vmatprep.subr.mxu0 0.0
    %97 = vmatpush1.msra.mxu0 0.0
    %98 = vmatprep.subr.mxu0 0.0
    %99 = vmatpush1.msra.mxu0 0.0
    %100 = vmatprep.subr.mxu0 0.0
    %101 = vmatpush1.msra.mxu0 0.0
    %102 = vmatprep.subr.mxu0 0.0
    %103 = vmatpush1.msra.mxu0 0.0
    %104 = vmatprep.subr.mxu0 0.0
    %105 = vmatpush1.msra.mxu0 0.0
    %106 = vmatprep.mubr.f32.mxu0 0.0
    %107 = vmatmul.mubr.f32.gmra.mrb[0].mxu0 %v40
    %v108 = vpop.f32.mrb[0].mxu0
    %v109 = vadd.f32 0.0, %v108
    %v110 = vpop.f32.mrb[0].mxu0
    %111 = vdwg.mxu0
    %v112 = vld [vmem:[%s2] sm:$0xff]
    %v113 = vld [vmem:[%s2 + $0x8] sm:$0xff]
    %v114 = vld [vmem:[%s2 + $0x10] sm:$0xff]
    %v115 = vld [vmem:[%s2 + $0x18] sm:$0xff]
    %v116 = vld [vmem:[%s2 + $0x20] sm:$0xff]
    %v117 = vld [vmem:[%s2 + $0x28] sm:$0xff]
    %v118 = vld [vmem:[%s2 + $0x30] sm:$0xff]
    %v119 = vld [vmem:[%s2 + $0x38] sm:$0xff]
    %s120 = scalar_lea.vmem %s1, 8
    %v121 = vld [vmem:[%s120] sm:$0xff]
    %v123 = vsel %vm38, %v121, 0
    %125 = vmatprep.subr.mxu0 0.0
    %126 = vmatpush1.msra.mxu0 %v36
    %127 = vmatprep.subr.mxu0 0.0
    %128 = vmatpush1.msra.mxu0 0.0
    %129 = vmatprep.subr.mxu0 0.0
    %130 = vmatpush1.msra.mxu0 0.0
    %131 = vmatprep.subr.mxu0 0.0
    %132 = vmatpush1.msra.mxu0 0.0
    %133 = vmatprep.subr.mxu0 0.0
    %134 = vmatpush1.msra.mxu0 0.0
    %135 = vmatprep.subr.mxu0 0.0
    %136 = vmatpush1.msra.mxu0 0.0
    %137 = vmatprep.subr.mxu0 0.0
    %138 = vmatpush1.msra.mxu0 0.0
    %139 = vmatprep.subr.mxu0 0.0
    %140 = vmatpush1.msra.mxu0 0.0
    %141 = vmatprep.subr.mxu0 0.0
    %142 = vmatpush1.msra.mxu0 0.0
    %143 = vmatprep.subr.mxu0 0.0
    %144 = vmatpush1.msra.mxu0 0.0
    %145 = vmatprep.subr.mxu0 0.0
    %146 = vmatpush1.msra.mxu0 0.0
    %147 = vmatprep.subr.mxu0 0.0
    %148 = vmatpush1.msra.mxu0 0.0
    %149 = vmatprep.subr.mxu0 0.0
    %150 = vmatpush1.msra.mxu0 0.0
    %151 = vmatprep.subr.mxu0 0.0
    %152 = vmatpush1.msra.mxu0 0.0
    %153 = vmatprep.subr.mxu0 0.0
    %154 = vmatpush1.msra.mxu0 0.0
    %155 = vmatprep.subr.mxu0 0.0
    %156 = vmatpush1.msra.mxu0 0.0
    %157 = vmatprep.subr.mxu0 0.0
    %158 = vmatpush1.msra.mxu0 0.0
    %159 = vmatprep.subr.mxu0 0.0
    %160 = vmatpush1.msra.mxu0 0.0
    %161 = vmatprep.subr.mxu0 0.0
    %162 = vmatpush1.msra.mxu0 0.0
    %163 = vmatprep.subr.mxu0 0.0
    %164 = vmatpush1.msra.mxu0 0.0
    %165 = vmatprep.subr.mxu0 0.0
    %166 = vmatpush1.msra.mxu0 0.0
    %167 = vmatprep.subr.mxu0 0.0
    %168 = vmatpush1.msra.mxu0 0.0
    %169 = vmatprep.subr.mxu0 0.0
    %170 = vmatpush1.msra.mxu0 0.0
    %171 = vmatprep.subr.mxu0 0.0
    %172 = vmatpush1.msra.mxu0 0.0
    %173 = vmatprep.subr.mxu0 0.0
    %174 = vmatpush1.msra.mxu0 0.0
    %175 = vmatprep.subr.mxu0 0.0
    %176 = vmatpush1.msra.mxu0 0.0
    %177 = vmatprep.subr.mxu0 0.0
    %178 = vmatpush1.msra.mxu0 0.0
    %179 = vmatprep.subr.mxu0 0.0
    %180 = vmatpush1.msra.mxu0 0.0
    %181 = vmatprep.subr.mxu0 0.0
    %182 = vmatpush1.msra.mxu0 0.0
    %183 = vmatprep.subr.mxu0 0.0
    %184 = vmatpush1.msra.mxu0 0.0
    %185 = vmatprep.subr.mxu0 0.0
    %186 = vmatpush1.msra.mxu0 0.0
    %187 = vmatprep.subr.mxu0 0.0
    %188 = vmatpush1.msra.mxu0 0.0
    %189 = vmatprep.mubr.f32.mxu0 0.0
    %190 = vmatmul.mubr.f32.gmra.mrb[0].mxu0 %v123
    %v191 = vpop.f32.mrb[0].mxu0
    %v192 = vadd.f32 0.0, %v191
    %v193 = vpop.f32.mrb[0].mxu0
    %194 = vdwg.mxu0
    %s195 = scalar_lea.vmem %s2, 64
    %v196 = vld [vmem:[%s195] sm:$0xff]
    %v197 = vld [vmem:[%s195 + $0x8] sm:$0xff]
    %v198 = vld [vmem:[%s195 + $0x10] sm:$0xff]
    %v199 = vld [vmem:[%s195 + $0x18] sm:$0xff]
    %v200 = vld [vmem:[%s195 + $0x20] sm:$0xff]
    %v201 = vld [vmem:[%s195 + $0x28] sm:$0xff]
    %v202 = vld [vmem:[%s195 + $0x30] sm:$0xff]
    %v203 = vld [vmem:[%s195 + $0x38] sm:$0xff]
    %vm204 = vcmask 523264
    %v206 = vsel %vm204, %v192, 0
    %208 = vmatprep.subr.mxu0 0.0
    %209 = vmatpush1.msra.mxu0 %v196
    %210 = vmatprep.subr.mxu0 0.0
    %211 = vmatpush1.msra.mxu0 %v197
    %212 = vmatprep.subr.mxu0 0.0
    %213 = vmatpush1.msra.mxu0 %v198
    %214 = vmatprep.subr.mxu0 0.0
    %215 = vmatpush1.msra.mxu0 %v199
    %216 = vmatprep.subr.mxu0 0.0
    %217 = vmatpush1.msra.mxu0 %v200
    %218 = vmatprep.subr.mxu0 0.0
    %219 = vmatpush1.msra.mxu0 %v201
    %220 = vmatprep.subr.mxu0 0.0
    %221 = vmatpush1.msra.mxu0 %v202
    %222 = vmatprep.subr.mxu0 0.0
    %223 = vmatpush1.msra.mxu0 %v203
    %224 = vmatprep.subr.mxu0 0.0
    %225 = vmatpush1.msra.mxu0 0.0
    %226 = vmatprep.subr.mxu0 0.0
    %227 = vmatpush1.msra.mxu0 0.0
    %228 = vmatprep.subr.mxu0 0.0
    %229 = vmatpush1.msra.mxu0 0.0
    %230 = vmatprep.subr.mxu0 0.0
    %231 = vmatpush1.msra.mxu0 0.0
    %232 = vmatprep.subr.mxu0 0.0
    %233 = vmatpush1.msra.mxu0 0.0
    %234 = vmatprep.subr.mxu0 0.0
    %235 = vmatpush1.msra.mxu0 0.0
    %236 = vmatprep.subr.mxu0 0.0
    %237 = vmatpush1.msra.mxu0 0.0
    %238 = vmatprep.subr.mxu0 0.0
    %239 = vmatpush1.msra.mxu0 0.0
    %240 = vmatprep.subr.mxu0 0.0
    %241 = vmatpush1.msra.mxu0 0.0
    %242 = vmatprep.subr.mxu0 0.0
    %243 = vmatpush1.msra.mxu0 0.0
    %244 = vmatprep.subr.mxu0 0.0
    %245 = vmatpush1.msra.mxu0 0.0
    %246 = vmatprep.subr.mxu0 0.0
    %247 = vmatpush1.msra.mxu0 0.0
    %248 = vmatprep.subr.mxu0 0.0
    %249 = vmatpush1.msra.mxu0 0.0
    %250 = vmatprep.subr.mxu0 0.0
    %251 = vmatpush1.msra.mxu0 0.0
    %252 = vmatprep.subr.mxu0 0.0
    %253 = vmatpush1.msra.mxu0 0.0
    %254 = vmatprep.subr.mxu0 0.0
    %255 = vmatpush1.msra.mxu0 0.0
    %256 = vmatprep.subr.mxu0 0.0
    %257 = vmatpush1.msra.mxu0 0.0
    %258 = vmatprep.subr.mxu0 0.0
    %259 = vmatpush1.msra.mxu0 0.0
    %260 = vmatprep.subr.mxu0 0.0
    %261 = vmatpush1.msra.mxu0 0.0
    %262 = vmatprep.subr.mxu0 0.0
    %263 = vmatpush1.msra.mxu0 0.0
    %264 = vmatprep.subr.mxu0 0.0
    %265 = vmatpush1.msra.mxu0 0.0
    %266 = vmatprep.subr.mxu0 0.0
    %267 = vmatpush1.msra.mxu0 0.0
    %268 = vmatprep.subr.mxu0 0.0
    %269 = vmatpush1.msra.mxu0 0.0
    %270 = vmatprep.subr.mxu0 0.0
    %271 = vmatpush1.msra.mxu0 0.0
    %272 = vmatprep.mubr.f32.mxu0 0.0
    %273 = vmatmul.mubr.f32.gmra.mrb[0].mxu0 %v206
    %v274 = vpop.f32.mrb[0].mxu0
    %v275 = vadd.f32 0.0, %v274
    %v276 = vpop.f32.mrb[0].mxu0
    %277 = vdwg.mxu0
    %v279 = vsel %vm204, %v109, 0
    %281 = vmatprep.subr.mxu0 0.0
    %282 = vmatpush1.msra.mxu0 %v112
    %283 = vmatprep.subr.mxu0 0.0
    %284 = vmatpush1.msra.mxu0 %v113
    %285 = vmatprep.subr.mxu0 0.0
    %286 = vmatpush1.msra.mxu0 %v114
    %287 = vmatprep.subr.mxu0 0.0
    %288 = vmatpush1.msra.mxu0 %v115
    %289 = vmatprep.subr.mxu0 0.0
    %290 = vmatpush1.msra.mxu0 %v116
    %291 = vmatprep.subr.mxu0 0.0
    %292 = vmatpush1.msra.mxu0 %v117
    %293 = vmatprep.subr.mxu0 0.0
    %294 = vmatpush1.msra.mxu0 %v118
    %295 = vmatprep.subr.mxu0 0.0
    %296 = vmatpush1.msra.mxu0 %v119
    %297 = vmatprep.subr.mxu0 0.0
    %298 = vmatpush1.msra.mxu0 0.0
    %299 = vmatprep.subr.mxu0 0.0
    %300 = vmatpush1.msra.mxu0 0.0
    %301 = vmatprep.subr.mxu0 0.0
    %302 = vmatpush1.msra.mxu0 0.0
    %303 = vmatprep.subr.mxu0 0.0
    %304 = vmatpush1.msra.mxu0 0.0
    %305 = vmatprep.subr.mxu0 0.0
    %306 = vmatpush1.msra.mxu0 0.0
    %307 = vmatprep.subr.mxu0 0.0
    %308 = vmatpush1.msra.mxu0 0.0
    %309 = vmatprep.subr.mxu0 0.0
    %310 = vmatpush1.msra.mxu0 0.0
    %311 = vmatprep.subr.mxu0 0.0
    %312 = vmatpush1.msra.mxu0 0.0
    %313 = vmatprep.subr.mxu0 0.0
    %314 = vmatpush1.msra.mxu0 0.0
    %315 = vmatprep.subr.mxu0 0.0
    %316 = vmatpush1.msra.mxu0 0.0
    %317 = vmatprep.subr.mxu0 0.0
    %318 = vmatpush1.msra.mxu0 0.0
    %319 = vmatprep.subr.mxu0 0.0
    %320 = vmatpush1.msra.mxu0 0.0
    %321 = vmatprep.subr.mxu0 0.0
    %322 = vmatpush1.msra.mxu0 0.0
    %323 = vmatprep.subr.mxu0 0.0
    %324 = vmatpush1.msra.mxu0 0.0
    %325 = vmatprep.subr.mxu0 0.0
    %326 = vmatpush1.msra.mxu0 0.0
    %327 = vmatprep.subr.mxu0 0.0
    %328 = vmatpush1.msra.mxu0 0.0
    %329 = vmatprep.subr.mxu0 0.0
    %330 = vmatpush1.msra.mxu0 0.0
    %331 = vmatprep.subr.mxu0 0.0
    %332 = vmatpush1.msra.mxu0 0.0
    %333 = vmatprep.subr.mxu0 0.0
    %334 = vmatpush1.msra.mxu0 0.0
    %335 = vmatprep.subr.mxu0 0.0
    %336 = vmatpush1.msra.mxu0 0.0
    %337 = vmatprep.subr.mxu0 0.0
    %338 = vmatpush1.msra.mxu0 0.0
    %339 = vmatprep.subr.mxu0 0.0
    %340 = vmatpush1.msra.mxu0 0.0
    %341 = vmatprep.subr.mxu0 0.0
    %342 = vmatpush1.msra.mxu0 0.0
    %343 = vmatprep.subr.mxu0 0.0
    %344 = vmatpush1.msra.mxu0 0.0
    %345 = vmatprep.mubr.f32.mxu0 0.0
    %346 = vmatmul.mubr.f32.gmra.mrb[0].mxu0 %v279
    %v347 = vpop.f32.mrb[0].mxu0
    %v348 = vadd.f32 %v275, %v347
    %v349 = vpop.f32.mrb[0].mxu0
    %350 = vdwg.mxu0
    %s351 = scalar_lea.vmem %s1, 16
    %v352 = vld [vmem:[%s351] sm:$0xff]
    %v354 = vsel %vm38, %v352, 0
    %356 = vmatprep.subr.mxu0 0.0
    %357 = vmatpush1.msra.mxu0 %v36
    %358 = vmatprep.subr.mxu0 0.0
    %359 = vmatpush1.msra.mxu0 0.0
    %360 = vmatprep.subr.mxu0 0.0
    %361 = vmatpush1.msra.mxu0 0.0
    %362 = vmatprep.subr.mxu0 0.0
    %363 = vmatpush1.msra.mxu0 0.0
    %364 = vmatprep.subr.mxu0 0.0
    %365 = vmatpush1.msra.mxu0 0.0
    %366 = vmatprep.subr.mxu0 0.0
    %367 = vmatpush1.msra.mxu0 0.0
    %368 = vmatprep.subr.mxu0 0.0
    %369 = vmatpush1.msra.mxu0 0.0
    %370 = vmatprep.subr.mxu0 0.0
    %371 = vmatpush1.msra.mxu0 0.0
    %372 = vmatprep.subr.mxu0 0.0
    %373 = vmatpush1.msra.mxu0 0.0
    %374 = vmatprep.subr.mxu0 0.0
    %375 = vmatpush1.msra.mxu0 0.0
    %376 = vmatprep.subr.mxu0 0.0
    %377 = vmatpush1.msra.mxu0 0.0
    %378 = vmatprep.subr.mxu0 0.0
    %379 = vmatpush1.msra.mxu0 0.0
    %380 = vmatprep.subr.mxu0 0.0
    %381 = vmatpush1.msra.mxu0 0.0
    %382 = vmatprep.subr.mxu0 0.0
    %383 = vmatpush1.msra.mxu0 0.0
    %384 = vmatprep.subr.mxu0 0.0
    %385 = vmatpush1.msra.mxu0 0.0
    %386 = vmatprep.subr.mxu0 0.0
    %387 = vmatpush1.msra.mxu0 0.0
    %388 = vmatprep.subr.mxu0 0.0
    %389 = vmatpush1.msra.mxu0 0.0
    %390 = vmatprep.subr.mxu0 0.0
    %391 = vmatpush1.msra.mxu0 0.0
    %392 = vmatprep.subr.mxu0 0.0
    %393 = vmatpush1.msra.mxu0 0.0
    %394 = vmatprep.subr.mxu0 0.0
    %395 = vmatpush1.msra.mxu0 0.0
    %396 = vmatprep.subr.mxu0 0.0
    %397 = vmatpush1.msra.mxu0 0.0
    %398 = vmatprep.subr.mxu0 0.0
    %399 = vmatpush1.msra.mxu0 0.0
    %400 = vmatprep.subr.mxu0 0.0
    %401 = vmatpush1.msra.mxu0 0.0
    %402 = vmatprep.subr.mxu0 0.0
    %403 = vmatpush1.msra.mxu0 0.0
    %404 = vmatprep.subr.mxu0 0.0
    %405 = vmatpush1.msra.mxu0 0.0
    %406 = vmatprep.subr.mxu0 0.0
    %407 = vmatpush1.msra.mxu0 0.0
    %408 = vmatprep.subr.mxu0 0.0
    %409 = vmatpush1.msra.mxu0 0.0
    %410 = vmatprep.subr.mxu0 0.0
    %411 = vmatpush1.msra.mxu0 0.0
    %412 = vmatprep.subr.mxu0 0.0
    %413 = vmatpush1.msra.mxu0 0.0
    %414 = vmatprep.subr.mxu0 0.0
    %415 = vmatpush1.msra.mxu0 0.0
    %416 = vmatprep.subr.mxu0 0.0
    %417 = vmatpush1.msra.mxu0 0.0
    %418 = vmatprep.subr.mxu0 0.0
    %419 = vmatpush1.msra.mxu0 0.0
    %420 = vmatprep.mubr.f32.mxu0 0.0
    %421 = vmatmul.mubr.f32.gmra.mrb[0].mxu0 %v354
    %v422 = vpop.f32.mrb[0].mxu0
    %v423 = vadd.f32 0.0, %v422
    %v424 = vpop.f32.mrb[0].mxu0
    %425 = vdwg.mxu0
    %s426 = scalar_lea.vmem %s2, 128
    %v427 = vld [vmem:[%s426] sm:$0xff]
    %v428 = vld [vmem:[%s426 + $0x8] sm:$0xff]
    %v429 = vld [vmem:[%s426 + $0x10] sm:$0xff]
    %v430 = vld [vmem:[%s426 + $0x18] sm:$0xff]
    %v431 = vld [vmem:[%s426 + $0x20] sm:$0xff]
    %v432 = vld [vmem:[%s426 + $0x28] sm:$0xff]
    %v433 = vld [vmem:[%s426 + $0x30] sm:$0xff]
    %v434 = vld [vmem:[%s426 + $0x38] sm:$0xff]
    %v436 = vsel %vm204, %v423, 0
    %438 = vmatprep.subr.mxu0 0.0
    %439 = vmatpush1.msra.mxu0 %v427
    %440 = vmatprep.subr.mxu0 0.0
    %441 = vmatpush1.msra.mxu0 %v428
    %442 = vmatprep.subr.mxu0 0.0
    %443 = vmatpush1.msra.mxu0 %v429
    %444 = vmatprep.subr.mxu0 0.0
    %445 = vmatpush1.msra.mxu0 %v430
    %446 = vmatprep.subr.mxu0 0.0
    %447 = vmatpush1.msra.mxu0 %v431
    %448 = vmatprep.subr.mxu0 0.0
    %449 = vmatpush1.msra.mxu0 %v432
    %450 = vmatprep.subr.mxu0 0.0
    %451 = vmatpush1.msra.mxu0 %v433
    %452 = vmatprep.subr.mxu0 0.0
    %453 = vmatpush1.msra.mxu0 %v434
    %454 = vmatprep.subr.mxu0 0.0
    %455 = vmatpush1.msra.mxu0 0.0
    %456 = vmatprep.subr.mxu0 0.0
    %457 = vmatpush1.msra.mxu0 0.0
    %458 = vmatprep.subr.mxu0 0.0
    %459 = vmatpush1.msra.mxu0 0.0
    %460 = vmatprep.subr.mxu0 0.0
    %461 = vmatpush1.msra.mxu0 0.0
    %462 = vmatprep.subr.mxu0 0.0
    %463 = vmatpush1.msra.mxu0 0.0
    %464 = vmatprep.subr.mxu0 0.0
    %465 = vmatpush1.msra.mxu0 0.0
    %466 = vmatprep.subr.mxu0 0.0
    %467 = vmatpush1.msra.mxu0 0.0
    %468 = vmatprep.subr.mxu0 0.0
    %469 = vmatpush1.msra.mxu0 0.0
    %470 = vmatprep.subr.mxu0 0.0
    %471 = vmatpush1.msra.mxu0 0.0
    %472 = vmatprep.subr.mxu0 0.0
    %473 = vmatpush1.msra.mxu0 0.0
    %474 = vmatprep.subr.mxu0 0.0
    %475 = vmatpush1.msra.mxu0 0.0
    %476 = vmatprep.subr.mxu0 0.0
    %477 = vmatpush1.msra.mxu0 0.0
    %478 = vmatprep.subr.mxu0 0.0
    %479 = vmatpush1.msra.mxu0 0.0
    %480 = vmatprep.subr.mxu0 0.0
    %481 = vmatpush1.msra.mxu0 0.0
    %482 = vmatprep.subr.mxu0 0.0
    %483 = vmatpush1.msra.mxu0 0.0
    %484 = vmatprep.subr.mxu0 0.0
    %485 = vmatpush1.msra.mxu0 0.0
    %486 = vmatprep.subr.mxu0 0.0
    %487 = vmatpush1.msra.mxu0 0.0
    %488 = vmatprep.subr.mxu0 0.0
    %489 = vmatpush1.msra.mxu0 0.0
    %490 = vmatprep.subr.mxu0 0.0
    %491 = vmatpush1.msra.mxu0 0.0
    %492 = vmatprep.subr.mxu0 0.0
    %493 = vmatpush1.msra.mxu0 0.0
    %494 = vmatprep.subr.mxu0 0.0
    %495 = vmatpush1.msra.mxu0 0.0
    %496 = vmatprep.subr.mxu0 0.0
    %497 = vmatpush1.msra.mxu0 0.0
    %498 = vmatprep.subr.mxu0 0.0
    %499 = vmatpush1.msra.mxu0 0.0
    %500 = vmatprep.subr.mxu0 0.0
    %501 = vmatpush1.msra.mxu0 0.0
    %502 = vmatprep.mubr.f32.mxu0 0.0
    %503 = vmatmul.mubr.f32.gmra.mrb[0].mxu0 %v436
    %v504 = vpop.f32.mrb[0].mxu0
    %v505 = vadd.f32 0.0, %v504
    %v506 = vpop.f32.mrb[0].mxu0
    %507 = vdwg.mxu0
    %v508 = vadd.f32 %v348, %v505
    %v509 = vld [vmem:[%s3] sm:$0x1]
    %v511 = vlaneseq
    %v512 = vshrl.u32 %v511, 7
    %v513 = vsub.s32 0, %v512
    %v514 = vrot.slane %v509, %v513
    %v516 = vadd.f32 %v508, %v514
    %v517 = vmax.f32 %v516, 0.0
    %v518 = vld [vmem:[%s4] sm:$0xff]
    %v519 = vld [vmem:[%s4 + $0x8] sm:$0xff]
    %v521 = vsel %vm38, %v518, 0
    %v524 = vsel %vm38, %v519, 0
    %526 = vmatprep.subr.mxu0 0.0
    %527 = vmatpush1.msra.mxu0 %v517
    %528 = vmatprep.subr.mxu0 0.0
    %529 = vmatpush1.msra.mxu0 0.0
    %530 = vmatprep.subr.mxu0 0.0
    %531 = vmatpush1.msra.mxu0 0.0
    %532 = vmatprep.subr.mxu0 0.0
    %533 = vmatpush1.msra.mxu0 0.0
    %534 = vmatprep.subr.mxu0 0.0
    %535 = vmatpush1.msra.mxu0 0.0
    %536 = vmatprep.subr.mxu0 0.0
    %537 = vmatpush1.msra.mxu0 0.0
    %538 = vmatprep.subr.mxu0 0.0
    %539 = vmatpush1.msra.mxu0 0.0
    %540 = vmatprep.subr.mxu0 0.0
    %541 = vmatpush1.msra.mxu0 0.0
    %542 = vmatprep.subr.mxu0 0.0
    %543 = vmatpush1.msra.mxu0 0.0
    %544 = vmatprep.subr.mxu0 0.0
    %545 = vmatpush1.msra.mxu0 0.0
    %546 = vmatprep.subr.mxu0 0.0
    %547 = vmatpush1.msra.mxu0 0.0
    %548 = vmatprep.subr.mxu0 0.0
    %549 = vmatpush1.msra.mxu0 0.0
    %550 = vmatprep.subr.mxu0 0.0
    %551 = vmatpush1.msra.mxu0 0.0
    %552 = vmatprep.subr.mxu0 0.0
    %553 = vmatpush1.msra.mxu0 0.0
    %554 = vmatprep.subr.mxu0 0.0
    %555 = vmatpush1.msra.mxu0 0.0
    %556 = vmatprep.subr.mxu0 0.0
    %557 = vmatpush1.msra.mxu0 0.0
    %558 = vmatprep.subr.mxu0 0.0
    %559 = vmatpush1.msra.mxu0 0.0
    %560 = vmatprep.subr.mxu0 0.0
    %561 = vmatpush1.msra.mxu0 0.0
    %562 = vmatprep.subr.mxu0 0.0
    %563 = vmatpush1.msra.mxu0 0.0
    %564 = vmatprep.subr.mxu0 0.0
    %565 = vmatpush1.msra.mxu0 0.0
    %566 = vmatprep.subr.mxu0 0.0
    %567 = vmatpush1.msra.mxu0 0.0
    %568 = vmatprep.subr.mxu0 0.0
    %569 = vmatpush1.msra.mxu0 0.0
    %570 = vmatprep.subr.mxu0 0.0
    %571 = vmatpush1.msra.mxu0 0.0
    %572 = vmatprep.subr.mxu0 0.0
    %573 = vmatpush1.msra.mxu0 0.0
    %574 = vmatprep.subr.mxu0 0.0
    %575 = vmatpush1.msra.mxu0 0.0
    %576 = vmatprep.subr.mxu0 0.0
    %577 = vmatpush1.msra.mxu0 0.0
    %578 = vmatprep.subr.mxu0 0.0
    %579 = vmatpush1.msra.mxu0 0.0
    %580 = vmatprep.subr.mxu0 0.0
    %581 = vmatpush1.msra.mxu0 0.0
    %582 = vmatprep.subr.mxu0 0.0
    %583 = vmatpush1.msra.mxu0 0.0
    %584 = vmatprep.subr.mxu0 0.0
    %585 = vmatpush1.msra.mxu0 0.0
    %586 = vmatprep.subr.mxu0 0.0
    %587 = vmatpush1.msra.mxu0 0.0
    %588 = vmatprep.subr.mxu0 0.0
    %589 = vmatpush1.msra.mxu0 0.0
    %590 = vmatprep.mubr.f32.mxu0 0.0
    %591 = vmatmul.mubr.f32.gmra.mrb[0].mxu0 %v521
    %v592 = vpop.f32.mrb[0].mxu0
    %v593 = vadd.f32 0.0, %v592
    %v594 = vpop.f32.mrb[0].mxu0
    %595 = vmatprep.mubr.f32.mxu0 0.0
    %596 = vmatmul.mubr.f32.gmra.mrb[0].mxu0 %v524
    %v597 = vpop.f32.mrb[0].mxu0
    %v598 = vadd.f32 0.0, %v597
    %v599 = vpop.f32.mrb[0].mxu0
    %600 = vdwg.mxu0
    %v601 = vld [vmem:[%s5] sm:$0xff]
    %v602 = vld [vmem:[%s5 + $0x8] sm:$0xff]
    %v603 = vld [vmem:[%s5 + $0x10] sm:$0xff]
    %v604 = vld [vmem:[%s5 + $0x18] sm:$0xff]
    %v605 = vld [vmem:[%s5 + $0x20] sm:$0xff]
    %v606 = vld [vmem:[%s5 + $0x28] sm:$0xff]
    %v607 = vld [vmem:[%s5 + $0x30] sm:$0xff]
    %v608 = vld [vmem:[%s5 + $0x38] sm:$0xff]
    %v609 = vld [vmem:[%s5 + $0x40] sm:$0xff]
    %v610 = vld [vmem:[%s5 + $0x48] sm:$0xff]
    %v611 = vld [vmem:[%s5 + $0x50] sm:$0xff]
    %v612 = vld [vmem:[%s5 + $0x58] sm:$0xff]
    %v613 = vld [vmem:[%s5 + $0x60] sm:$0xff]
    %v614 = vld [vmem:[%s5 + $0x68] sm:$0xff]
    %v615 = vld [vmem:[%s5 + $0x70] sm:$0xff]
    %v616 = vld [vmem:[%s5 + $0x78] sm:$0xff]
    %s617 = scalar_lea.vmem %s4, 16
    %v618 = vld [vmem:[%s617] sm:$0xff]
    %v619 = vld [vmem:[%s617 + $0x8] sm:$0xff]
    %v621 = vsel %vm38, %v618, 0
    %v624 = vsel %vm38, %v619, 0
    %626 = vmatprep.subr.mxu0 0.0
    %627 = vmatpush1.msra.mxu0 %v517
    %628 = vmatprep.subr.mxu0 0.0
    %629 = vmatpush1.msra.mxu0 0.0
    %630 = vmatprep.subr.mxu0 0.0
    %631 = vmatpush1.msra.mxu0 0.0
    %632 = vmatprep.subr.mxu0 0.0
    %633 = vmatpush1.msra.mxu0 0.0
    %634 = vmatprep.subr.mxu0 0.0
    %635 = vmatpush1.msra.mxu0 0.0
    %636 = vmatprep.subr.mxu0 0.0
    %637 = vmatpush1.msra.mxu0 0.0
    %638 = vmatprep.subr.mxu0 0.0
    %639 = vmatpush1.msra.mxu0 0.0
    %640 = vmatprep.subr.mxu0 0.0
    %641 = vmatpush1.msra.mxu0 0.0
    %642 = vmatprep.subr.mxu0 0.0
    %643 = vmatpush1.msra.mxu0 0.0
    %644 = vmatprep.subr.mxu0 0.0
    %645 = vmatpush1.msra.mxu0 0.0
    %646 = vmatprep.subr.mxu0 0.0
    %647 = vmatpush1.msra.mxu0 0.0
    %648 = vmatprep.subr.mxu0 0.0
    %649 = vmatpush1.msra.mxu0 0.0
    %650 = vmatprep.subr.mxu0 0.0
    %651 = vmatpush1.msra.mxu0 0.0
    %652 = vmatprep.subr.mxu0 0.0
    %653 = vmatpush1.msra.mxu0 0.0
    %654 = vmatprep.subr.mxu0 0.0
    %655 = vmatpush1.msra.mxu0 0.0
    %656 = vmatprep.subr.mxu0 0.0
    %657 = vmatpush1.msra.mxu0 0.0
    %658 = vmatprep.subr.mxu0 0.0
    %659 = vmatpush1.msra.mxu0 0.0
    %660 = vmatprep.subr.mxu0 0.0
    %661 = vmatpush1.msra.mxu0 0.0
    %662 = vmatprep.subr.mxu0 0.0
    %663 = vmatpush1.msra.mxu0 0.0
    %664 = vmatprep.subr.mxu0 0.0
    %665 = vmatpush1.msra.mxu0 0.0
    %666 = vmatprep.subr.mxu0 0.0
    %667 = vmatpush1.msra.mxu0 0.0
    %668 = vmatprep.subr.mxu0 0.0
    %669 = vmatpush1.msra.mxu0 0.0
    %670 = vmatprep.subr.mxu0 0.0
    %671 = vmatpush1.msra.mxu0 0.0
    %672 = vmatprep.subr.mxu0 0.0
    %673 = vmatpush1.msra.mxu0 0.0
    %674 = vmatprep.subr.mxu0 0.0
    %675 = vmatpush1.msra.mxu0 0.0
    %676 = vmatprep.subr.mxu0 0.0
    %677 = vmatpush1.msra.mxu0 0.0
    %678 = vmatprep.subr.mxu0 0.0
    %679 = vmatpush1.msra.mxu0 0.0
    %680 = vmatprep.subr.mxu0 0.0
    %681 = vmatpush1.msra.mxu0 0.0
    %682 = vmatprep.subr.mxu0 0.0
    %683 = vmatpush1.msra.mxu0 0.0
    %684 = vmatprep.subr.mxu0 0.0
    %685 = vmatpush1.msra.mxu0 0.0
    %686 = vmatprep.subr.mxu0 0.0
    %687 = vmatpush1.msra.mxu0 0.0
    %688 = vmatprep.subr.mxu0 0.0
    %689 = vmatpush1.msra.mxu0 0.0
    %690 = vmatprep.mubr.f32.mxu0 0.0
    %691 = vmatmul.mubr.f32.gmra.mrb[0].mxu0 %v621
    %v692 = vpop.f32.mrb[0].mxu0
    %v693 = vadd.f32 0.0, %v692
    %v694 = vpop.f32.mrb[0].mxu0
    %695 = vmatprep.mubr.f32.mxu0 0.0
    %696 = vmatmul.mubr.f32.gmra.mrb[0].mxu0 %v624
    %v697 = vpop.f32.mrb[0].mxu0
    %v698 = vadd.f32 0.0, %v697
    %v699 = vpop.f32.mrb[0].mxu0
    %700 = vdwg.mxu0
    %s701 = scalar_lea.vmem %s5, 128
    %v702 = vld [vmem:[%s701] sm:$0xff]
    %v703 = vld [vmem:[%s701 + $0x8] sm:$0xff]
    %v704 = vld [vmem:[%s701 + $0x10] sm:$0xff]
    %v705 = vld [vmem:[%s701 + $0x18] sm:$0xff]
    %v706 = vld [vmem:[%s701 + $0x20] sm:$0xff]
    %v707 = vld [vmem:[%s701 + $0x28] sm:$0xff]
    %v708 = vld [vmem:[%s701 + $0x30] sm:$0xff]
    %v709 = vld [vmem:[%s701 + $0x38] sm:$0xff]
    %v710 = vld [vmem:[%s701 + $0x40] sm:$0xff]
    %v711 = vld [vmem:[%s701 + $0x48] sm:$0xff]
    %v712 = vld [vmem:[%s701 + $0x50] sm:$0xff]
    %v713 = vld [vmem:[%s701 + $0x58] sm:$0xff]
    %v714 = vld [vmem:[%s701 + $0x60] sm:$0xff]
    %v715 = vld [vmem:[%s701 + $0x68] sm:$0xff]
    %v716 = vld [vmem:[%s701 + $0x70] sm:$0xff]
    %v717 = vld [vmem:[%s701 + $0x78] sm:$0xff]
    %v719 = vsel %vm204, %v693, 0
    %v722 = vsel %vm204, %v698, 0
    %724 = vmatprep.subr.mxu0 %v703
    %725 = vmatpush1.msra.mxu0 %v702
    %726 = vmatprep.subr.mxu0 %v705
    %727 = vmatpush1.msra.mxu0 %v704
    %728 = vmatprep.subr.mxu0 %v707
    %729 = vmatpush1.msra.mxu0 %v706
    %730 = vmatprep.subr.mxu0 %v709
    %731 = vmatpush1.msra.mxu0 %v708
    %732 = vmatprep.subr.mxu0 %v711
    %733 = vmatpush1.msra.mxu0 %v710
    %734 = vmatprep.subr.mxu0 %v713
    %735 = vmatpush1.msra.mxu0 %v712
    %736 = vmatprep.subr.mxu0 %v715
    %737 = vmatpush1.msra.mxu0 %v714
    %738 = vmatprep.subr.mxu0 %v717
    %739 = vmatpush1.msra.mxu0 %v716
    %740 = vmatprep.subr.mxu0 0.0
    %741 = vmatpush1.msra.mxu0 0.0
    %742 = vmatprep.subr.mxu0 0.0
    %743 = vmatpush1.msra.mxu0 0.0
    %744 = vmatprep.subr.mxu0 0.0
    %745 = vmatpush1.msra.mxu0 0.0
    %746 = vmatprep.subr.mxu0 0.0
    %747 = vmatpush1.msra.mxu0 0.0
    %748 = vmatprep.subr.mxu0 0.0
    %749 = vmatpush1.msra.mxu0 0.0
    %750 = vmatprep.subr.mxu0 0.0
    %751 = vmatpush1.msra.mxu0 0.0
    %752 = vmatprep.subr.mxu0 0.0
    %753 = vmatpush1.msra.mxu0 0.0
    %754 = vmatprep.subr.mxu0 0.0
    %755 = vmatpush1.msra.mxu0 0.0
    %756 = vmatprep.subr.mxu0 0.0
    %757 = vmatpush1.msra.mxu0 0.0
    %758 = vmatprep.subr.mxu0 0.0
    %759 = vmatpush1.msra.mxu0 0.0
    %760 = vmatprep.subr.mxu0 0.0
    %761 = vmatpush1.msra.mxu0 0.0
    %762 = vmatprep.subr.mxu0 0.0
    %763 = vmatpush1.msra.mxu0 0.0
    %764 = vmatprep.subr.mxu0 0.0
    %765 = vmatpush1.msra.mxu0 0.0
    %766 = vmatprep.subr.mxu0 0.0
    %767 = vmatpush1.msra.mxu0 0.0
    %768 = vmatprep.subr.mxu0 0.0
    %769 = vmatpush1.msra.mxu0 0.0
    %770 = vmatprep.subr.mxu0 0.0
    %771 = vmatpush1.msra.mxu0 0.0
    %772 = vmatprep.subr.mxu0 0.0
    %773 = vmatpush1.msra.mxu0 0.0
    %774 = vmatprep.subr.mxu0 0.0
    %775 = vmatpush1.msra.mxu0 0.0
    %776 = vmatprep.subr.mxu0 0.0
    %777 = vmatpush1.msra.mxu0 0.0
    %778 = vmatprep.subr.mxu0 0.0
    %779 = vmatpush1.msra.mxu0 0.0
    %780 = vmatprep.subr.mxu0 0.0
    %781 = vmatpush1.msra.mxu0 0.0
    %782 = vmatprep.subr.mxu0 0.0
    %783 = vmatpush1.msra.mxu0 0.0
    %784 = vmatprep.subr.mxu0 0.0
    %785 = vmatpush1.msra.mxu0 0.0
    %786 = vmatprep.subr.mxu0 0.0
    %787 = vmatpush1.msra.mxu0 0.0
    %788 = vmatprep.mubr.f32.mxu0 0.0
    %789 = vmatmul.mubr.f32.gmra.mrb[0].mxu0 %v719
    %v790 = vpop.f32.mrb[0].mxu0
    %v791 = vadd.f32 0.0, %v790
    %v792 = vpop.f32.mrb[0].mxu0
    %v793 = vadd.f32 0.0, %v792
    %794 = vmatprep.mubr.f32.mxu0 0.0
    %795 = vmatmul.mubr.f32.gmra.mrb[0].mxu0 %v722
    %v796 = vpop.f32.mrb[0].mxu0
    %v797 = vadd.f32 0.0, %v796
    %v798 = vpop.f32.mrb[0].mxu0
    %v799 = vadd.f32 0.0, %v798
    %800 = vdwg.mxu0
    %v802 = vsel %vm204, %v593, 0
    %v805 = vsel %vm204, %v598, 0
    %807 = vmatprep.subr.mxu0 %v602
    %808 = vmatpush1.msra.mxu0 %v601
    %809 = vmatprep.subr.mxu0 %v604
    %810 = vmatpush1.msra.mxu0 %v603
    %811 = vmatprep.subr.mxu0 %v606
    %812 = vmatpush1.msra.mxu0 %v605
    %813 = vmatprep.subr.mxu0 %v608
    %814 = vmatpush1.msra.mxu0 %v607
    %815 = vmatprep.subr.mxu0 %v610
    %816 = vmatpush1.msra.mxu0 %v609
    %817 = vmatprep.subr.mxu0 %v612
    %818 = vmatpush1.msra.mxu0 %v611
    %819 = vmatprep.subr.mxu0 %v614
    %820 = vmatpush1.msra.mxu0 %v613
    %821 = vmatprep.subr.mxu0 %v616
    %822 = vmatpush1.msra.mxu0 %v615
    %823 = vmatprep.subr.mxu0 0.0
    %824 = vmatpush1.msra.mxu0 0.0
    %825 = vmatprep.subr.mxu0 0.0
    %826 = vmatpush1.msra.mxu0 0.0
    %827 = vmatprep.subr.mxu0 0.0
    %828 = vmatpush1.msra.mxu0 0.0
    %829 = vmatprep.subr.mxu0 0.0
    %830 = vmatpush1.msra.mxu0 0.0
    %831 = vmatprep.subr.mxu0 0.0
    %832 = vmatpush1.msra.mxu0 0.0
    %833 = vmatprep.subr.mxu0 0.0
    %834 = vmatpush1.msra.mxu0 0.0
    %835 = vmatprep.subr.mxu0 0.0
    %836 = vmatpush1.msra.mxu0 0.0
    %837 = vmatprep.subr.mxu0 0.0
    %838 = vmatpush1.msra.mxu0 0.0
    %839 = vmatprep.subr.mxu0 0.0
    %840 = vmatpush1.msra.mxu0 0.0
    %841 = vmatprep.subr.mxu0 0.0
    %842 = vmatpush1.msra.mxu0 0.0
    %843 = vmatprep.subr.mxu0 0.0
    %844 = vmatpush1.msra.mxu0 0.0
    %845 = vmatprep.subr.mxu0 0.0
    %846 = vmatpush1.msra.mxu0 0.0
    %847 = vmatprep.subr.mxu0 0.0
    %848 = vmatpush1.msra.mxu0 0.0
    %849 = vmatprep.subr.mxu0 0.0
    %850 = vmatpush1.msra.mxu0 0.0
    %851 = vmatprep.subr.mxu0 0.0
    %852 = vmatpush1.msra.mxu0 0.0
    %853 = vmatprep.subr.mxu0 0.0
    %854 = vmatpush1.msra.mxu0 0.0
    %855 = vmatprep.subr.mxu0 0.0
    %856 = vmatpush1.msra.mxu0 0.0
    %857 = vmatprep.subr.mxu0 0.0
    %858 = vmatpush1.msra.mxu0 0.0
    %859 = vmatprep.subr.mxu0 0.0
    %860 = vmatpush1.msra.mxu0 0.0
    %861 = vmatprep.subr.mxu0 0.0
    %862 = vmatpush1.msra.mxu0 0.0
    %863 = vmatprep.subr.mxu0 0.0
    %864 = vmatpush1.msra.mxu0 0.0
    %865 = vmatprep.subr.mxu0 0.0
    %866 = vmatpush1.msra.mxu0 0.0
    %867 = vmatprep.subr.mxu0 0.0
    %868 = vmatpush1.msra.mxu0 0.0
    %869 = vmatprep.subr.mxu0 0.0
    %870 = vmatpush1.msra.mxu0 0.0
    %871 = vmatprep.mubr.f32.mxu0 0.0
    %872 = vmatmul.mubr.f32.gmra.mrb[0].mxu0 %v802
    %v873 = vpop.f32.mrb[0].mxu0
    %v874 = vadd.f32 %v791, %v873
    %v875 = vpop.f32.mrb[0].mxu0
    %v876 = vadd.f32 %v793, %v875
    %877 = vmatprep.mubr.f32.mxu0 0.0
    %878 = vmatmul.mubr.f32.gmra.mrb[0].mxu0 %v805
    %v879 = vpop.f32.mrb[0].mxu0
    %v880 = vadd.f32 %v797, %v879
    %v881 = vpop.f32.mrb[0].mxu0
    %v882 = vadd.f32 %v799, %v881
    %883 = vdwg.mxu0
    %s884 = scalar_lea.vmem %s4, 32
    %v885 = vld [vmem:[%s884] sm:$0xff]
    %v886 = vld [vmem:[%s884 + $0x8] sm:$0xff]
    %v888 = vsel %vm38, %v885, 0
    %v891 = vsel %vm38, %v886, 0
    %893 = vmatprep.subr.mxu0 0.0
    %894 = vmatpush1.msra.mxu0 %v517
    %895 = vmatprep.subr.mxu0 0.0
    %896 = vmatpush1.msra.mxu0 0.0
    %897 = vmatprep.subr.mxu0 0.0
    %898 = vmatpush1.msra.mxu0 0.0
    %899 = vmatprep.subr.mxu0 0.0
    %900 = vmatpush1.msra.mxu0 0.0
    %901 = vmatprep.subr.mxu0 0.0
    %902 = vmatpush1.msra.mxu0 0.0
    %903 = vmatprep.subr.mxu0 0.0
    %904 = vmatpush1.msra.mxu0 0.0
    %905 = vmatprep.subr.mxu0 0.0
    %906 = vmatpush1.msra.mxu0 0.0
    %907 = vmatprep.subr.mxu0 0.0
    %908 = vmatpush1.msra.mxu0 0.0
    %909 = vmatprep.subr.mxu0 0.0
    %910 = vmatpush1.msra.mxu0 0.0
    %911 = vmatprep.subr.mxu0 0.0
    %912 = vmatpush1.msra.mxu0 0.0
    %913 = vmatprep.subr.mxu0 0.0
    %914 = vmatpush1.msra.mxu0 0.0
    %915 = vmatprep.subr.mxu0 0.0
    %916 = vmatpush1.msra.mxu0 0.0
    %917 = vmatprep.subr.mxu0 0.0
    %918 = vmatpush1.msra.mxu0 0.0
    %919 = vmatprep.subr.mxu0 0.0
    %920 = vmatpush1.msra.mxu0 0.0
    %921 = vmatprep.subr.mxu0 0.0
    %922 = vmatpush1.msra.mxu0 0.0
    %923 = vmatprep.subr.mxu0 0.0
    %924 = vmatpush1.msra.mxu0 0.0
    %925 = vmatprep.subr.mxu0 0.0
    %926 = vmatpush1.msra.mxu0 0.0
    %927 = vmatprep.subr.mxu0 0.0
    %928 = vmatpush1.msra.mxu0 0.0
    %929 = vmatprep.subr.mxu0 0.0
    %930 = vmatpush1.msra.mxu0 0.0
    %931 = vmatprep.subr.mxu0 0.0
    %932 = vmatpush1.msra.mxu0 0.0
    %933 = vmatprep.subr.mxu0 0.0
    %934 = vmatpush1.msra.mxu0 0.0
    %935 = vmatprep.subr.mxu0 0.0
    %936 = vmatpush1.msra.mxu0 0.0
    %937 = vmatprep.subr.mxu0 0.0
    %938 = vmatpush1.msra.mxu0 0.0
    %939 = vmatprep.subr.mxu0 0.0
    %940 = vmatpush1.msra.mxu0 0.0
    %941 = vmatprep.subr.mxu0 0.0
    %942 = vmatpush1.msra.mxu0 0.0
    %943 = vmatprep.subr.mxu0 0.0
    %944 = vmatpush1.msra.mxu0 0.0
    %945 = vmatprep.subr.mxu0 0.0
    %946 = vmatpush1.msra.mxu0 0.0
    %947 = vmatprep.subr.mxu0 0.0
    %948 = vmatpush1.msra.mxu0 0.0
    %949 = vmatprep.subr.mxu0 0.0
    %950 = vmatpush1.msra.mxu0 0.0
    %951 = vmatprep.subr.mxu0 0.0
    %952 = vmatpush1.msra.mxu0 0.0
    %953 = vmatprep.subr.mxu0 0.0
    %954 = vmatpush1.msra.mxu0 0.0
    %955 = vmatprep.subr.mxu0 0.0
    %956 = vmatpush1.msra.mxu0 0.0
    %957 = vmatprep.mubr.f32.mxu0 0.0
    %958 = vmatmul.mubr.f32.gmra.mrb[0].mxu0 %v888
    %v959 = vpop.f32.mrb[0].mxu0
    %v960 = vadd.f32 0.0, %v959
    %v961 = vpop.f32.mrb[0].mxu0
    %962 = vmatprep.mubr.f32.mxu0 0.0
    %963 = vmatmul.mubr.f32.gmra.mrb[0].mxu0 %v891
    %v964 = vpop.f32.mrb[0].mxu0
    %v965 = vadd.f32 0.0, %v964
    %v966 = vpop.f32.mrb[0].mxu0
    %967 = vdwg.mxu0
    %s968 = scalar_lea.vmem %s5, 256
    %v969 = vld [vmem:[%s968] sm:$0xff]
    %v970 = vld [vmem:[%s968 + $0x8] sm:$0xff]
    %v971 = vld [vmem:[%s968 + $0x10] sm:$0xff]
    %v972 = vld [vmem:[%s968 + $0x18] sm:$0xff]
    %v973 = vld [vmem:[%s968 + $0x20] sm:$0xff]
    %v974 = vld [vmem:[%s968 + $0x28] sm:$0xff]
    %v975 = vld [vmem:[%s968 + $0x30] sm:$0xff]
    %v976 = vld [vmem:[%s968 + $0x38] sm:$0xff]
    %v977 = vld [vmem:[%s968 + $0x40] sm:$0xff]
    %v978 = vld [vmem:[%s968 + $0x48] sm:$0xff]
    %v979 = vld [vmem:[%s968 + $0x50] sm:$0xff]
    %v980 = vld [vmem:[%s968 + $0x58] sm:$0xff]
    %v981 = vld [vmem:[%s968 + $0x60] sm:$0xff]
    %v982 = vld [vmem:[%s968 + $0x68] sm:$0xff]
    %v983 = vld [vmem:[%s968 + $0x70] sm:$0xff]
    %v984 = vld [vmem:[%s968 + $0x78] sm:$0xff]
    %v986 = vsel %vm204, %v960, 0
    %v989 = vsel %vm204, %v965, 0
    %991 = vmatprep.subr.mxu0 %v970
    %992 = vmatpush1.msra.mxu0 %v969
    %993 = vmatprep.subr.mxu0 %v972
    %994 = vmatpush1.msra.mxu0 %v971
    %995 = vmatprep.subr.mxu0 %v974
    %996 = vmatpush1.msra.mxu0 %v973
    %997 = vmatprep.subr.mxu0 %v976
    %998 = vmatpush1.msra.mxu0 %v975
    %999 = vmatprep.subr.mxu0 %v978
    %1000 = vmatpush1.msra.mxu0 %v977
    %1001 = vmatprep.subr.mxu0 %v980
    %1002 = vmatpush1.msra.mxu0 %v979
    %1003 = vmatprep.subr.mxu0 %v982
    %1004 = vmatpush1.msra.mxu0 %v981
    %1005 = vmatprep.subr.mxu0 %v984
    %1006 = vmatpush1.msra.mxu0 %v983
    %1007 = vmatprep.subr.mxu0 0.0
    %1008 = vmatpush1.msra.mxu0 0.0
    %1009 = vmatprep.subr.mxu0 0.0
    %1010 = vmatpush1.msra.mxu0 0.0
    %1011 = vmatprep.subr.mxu0 0.0
    %1012 = vmatpush1.msra.mxu0 0.0
    %1013 = vmatprep.subr.mxu0 0.0
    %1014 = vmatpush1.msra.mxu0 0.0
    %1015 = vmatprep.subr.mxu0 0.0
    %1016 = vmatpush1.msra.mxu0 0.0
    %1017 = vmatprep.subr.mxu0 0.0
    %1018 = vmatpush1.msra.mxu0 0.0
    %1019 = vmatprep.subr.mxu0 0.0
    %1020 = vmatpush1.msra.mxu0 0.0
    %1021 = vmatprep.subr.mxu0 0.0
    %1022 = vmatpush1.msra.mxu0 0.0
    %1023 = vmatprep.subr.mxu0 0.0
    %1024 = vmatpush1.msra.mxu0 0.0
    %1025 = vmatprep.subr.mxu0 0.0
    %1026 = vmatpush1.msra.mxu0 0.0
    %1027 = vmatprep.subr.mxu0 0.0
    %1028 = vmatpush1.msra.mxu0 0.0
    %1029 = vmatprep.subr.mxu0 0.0
    %1030 = vmatpush1.msra.mxu0 0.0
    %1031 = vmatprep.subr.mxu0 0.0
    %1032 = vmatpush1.msra.mxu0 0.0
    %1033 = vmatprep.subr.mxu0 0.0
    %1034 = vmatpush1.msra.mxu0 0.0
    %1035 = vmatprep.subr.mxu0 0.0
    %1036 = vmatpush1.msra.mxu0 0.0
    %1037 = vmatprep.subr.mxu0 0.0
    %1038 = vmatpush1.msra.mxu0 0.0
    %1039 = vmatprep.subr.mxu0 0.0
    %1040 = vmatpush1.msra.mxu0 0.0
    %1041 = vmatprep.subr.mxu0 0.0
    %1042 = vmatpush1.msra.mxu0 0.0
    %1043 = vmatprep.subr.mxu0 0.0
    %1044 = vmatpush1.msra.mxu0 0.0
    %1045 = vmatprep.subr.mxu0 0.0
    %1046 = vmatpush1.msra.mxu0 0.0
    %1047 = vmatprep.subr.mxu0 0.0
    %1048 = vmatpush1.msra.mxu0 0.0
    %1049 = vmatprep.subr.mxu0 0.0
    %1050 = vmatpush1.msra.mxu0 0.0
    %1051 = vmatprep.subr.mxu0 0.0
    %1052 = vmatpush1.msra.mxu0 0.0
    %1053 = vmatprep.subr.mxu0 0.0
    %1054 = vmatpush1.msra.mxu0 0.0
    %1055 = vmatprep.mubr.f32.mxu0 0.0
    %1056 = vmatmul.mubr.f32.gmra.mrb[0].mxu0 %v986
    %v1057 = vpop.f32.mrb[0].mxu0
    %v1058 = vadd.f32 0.0, %v1057
    %v1059 = vpop.f32.mrb[0].mxu0
    %v1060 = vadd.f32 0.0, %v1059
    %1061 = vmatprep.mubr.f32.mxu0 0.0
    %1062 = vmatmul.mubr.f32.gmra.mrb[0].mxu0 %v989
    %v1063 = vpop.f32.mrb[0].mxu0
    %v1064 = vadd.f32 0.0, %v1063
    %v1065 = vpop.f32.mrb[0].mxu0
    %v1066 = vadd.f32 0.0, %v1065
    %1067 = vdwg.mxu0
    %v1068 = vadd.f32 %v874, %v1058
    %v1069 = vadd.f32 %v876, %v1060
    %v1070 = vadd.f32 %v880, %v1064
    %v1071 = vadd.f32 %v882, %v1066
    %v1072 = vld [vmem:[%s6] sm:$0x3]
    %v1074 = vlaneseq
    %v1075 = vshrl.u32 %v1074, 7
    %v1076 = vsub.s32 0, %v1075
    %v1077 = vrot.slane %v1072, %v1076
    %v1078 = vlaneseq
    %v1079 = vshrl.u32 %v1078, 7
    %v1080 = vsub.s32 1, %v1079
    %v1081 = vrot.slane %v1072, %v1080
    %v1084 = vadd.f32 %v1068, %v1077
    %v1085 = vadd.f32 %v1069, %v1081
    %v1086 = vadd.f32 %v1070, %v1077
    %v1087 = vadd.f32 %v1071, %v1081
    %v1088 = vmax.f32 %v1084, 0.0
    %v1089 = vmax.f32 %v1085, 0.0
    %v1090 = vmax.f32 %v1086, 0.0
    %v1091 = vmax.f32 %v1087, 0.0
    %v1092 = vld [vmem:[%s7] sm:$0xff]
    %v1093 = vld [vmem:[%s7 + $0x8] sm:$0xff]
    %v1094 = vld [vmem:[%s7 + $0x10] sm:$0xff]
    %v1095 = vld [vmem:[%s7 + $0x18] sm:$0xff]
    %v1096 = vld [vmem:[%s7 + $0x20] sm:$0xff]
    %v1097 = vld [vmem:[%s7 + $0x28] sm:$0xff]
    %v1098 = vld [vmem:[%s7 + $0x30] sm:$0xff]
    %v1099 = vld [vmem:[%s7 + $0x38] sm:$0xff]
    %v1100 = vld [vmem:[%s7 + $0x40] sm:$0xff]
    %v1101 = vld [vmem:[%s7 + $0x48] sm:$0xff]
    %vm1102 = vcmask 130048
    %v1104 = vsel %vm1102, %v1092, 0
    %v1107 = vsel %vm1102, %v1093, 0
    %v1110 = vsel %vm1102, %v1094, 0
    %v1113 = vsel %vm1102, %v1095, 0
    %v1116 = vsel %vm1102, %v1096, 0
    %v1119 = vsel %vm1102, %v1097, 0
    %v1122 = vsel %vm1102, %v1098, 0
    %v1125 = vsel %vm1102, %v1099, 0
    %v1128 = vsel %vm1102, %v1100, 0
    %v1131 = vsel %vm1102, %v1101, 0
    %1133 = vmatprep.subr.mxu0 %v1089
    %1134 = vmatpush1.msra.mxu0 %v1088
    %1135 = vmatprep.subr.mxu0 %v1091
    %1136 = vmatpush1.msra.mxu0 %v1090
    %1137 = vmatprep.subr.mxu0 0.0
    %1138 = vmatpush1.msra.mxu0 0.0
    %1139 = vmatprep.subr.mxu0 0.0
    %1140 = vmatpush1.msra.mxu0 0.0
    %1141 = vmatprep.subr.mxu0 0.0
    %1142 = vmatpush1.msra.mxu0 0.0
    %1143 = vmatprep.subr.mxu0 0.0
    %1144 = vmatpush1.msra.mxu0 0.0
    %1145 = vmatprep.subr.mxu0 0.0
    %1146 = vmatpush1.msra.mxu0 0.0
    %1147 = vmatprep.subr.mxu0 0.0
    %1148 = vmatpush1.msra.mxu0 0.0
    %1149 = vmatprep.subr.mxu0 0.0
    %1150 = vmatpush1.msra.mxu0 0.0
    %1151 = vmatprep.subr.mxu0 0.0
    %1152 = vmatpush1.msra.mxu0 0.0
    %1153 = vmatprep.subr.mxu0 0.0
    %1154 = vmatpush1.msra.mxu0 0.0
    %1155 = vmatprep.subr.mxu0 0.0
    %1156 = vmatpush1.msra.mxu0 0.0
    %1157 = vmatprep.subr.mxu0 0.0
    %1158 = vmatpush1.msra.mxu0 0.0
    %1159 = vmatprep.subr.mxu0 0.0
    %1160 = vmatpush1.msra.mxu0 0.0
    %1161 = vmatprep.subr.mxu0 0.0
    %1162 = vmatpush1.msra.mxu0 0.0
    %1163 = vmatprep.subr.mxu0 0.0
    %1164 = vmatpush1.msra.mxu0 0.0
    %1165 = vmatprep.subr.mxu0 0.0
    %1166 = vmatpush1.msra.mxu0 0.0
    %1167 = vmatprep.subr.mxu0 0.0
    %1168 = vmatpush1.msra.mxu0 0.0
    %1169 = vmatprep.subr.mxu0 0.0
    %1170 = vmatpush1.msra.mxu0 0.0
    %1171 = vmatprep.subr.mxu0 0.0
    %1172 = vmatpush1.msra.mxu0 0.0
    %1173 = vmatprep.subr.mxu0 0.0
    %1174 = vmatpush1.msra.mxu0 0.0
    %1175 = vmatprep.subr.mxu0 0.0
    %1176 = vmatpush1.msra.mxu0 0.0
    %1177 = vmatprep.subr.mxu0 0.0
    %1178 = vmatpush1.msra.mxu0 0.0
    %1179 = vmatprep.subr.mxu0 0.0
    %1180 = vmatpush1.msra.mxu0 0.0
    %1181 = vmatprep.subr.mxu0 0.0
    %1182 = vmatpush1.msra.mxu0 0.0
    %1183 = vmatprep.subr.mxu0 0.0
    %1184 = vmatpush1.msra.mxu0 0.0
    %1185 = vmatprep.subr.mxu0 0.0
    %1186 = vmatpush1.msra.mxu0 0.0
    %1187 = vmatprep.subr.mxu0 0.0
    %1188 = vmatpush1.msra.mxu0 0.0
    %1189 = vmatprep.subr.mxu0 0.0
    %1190 = vmatpush1.msra.mxu0 0.0
    %1191 = vmatprep.subr.mxu0 0.0
    %1192 = vmatpush1.msra.mxu0 0.0
    %1193 = vmatprep.subr.mxu0 0.0
    %1194 = vmatpush1.msra.mxu0 0.0
    %1195 = vmatprep.subr.mxu0 0.0
    %1196 = vmatpush1.msra.mxu0 0.0
    %1197 = vmatprep.mubr.f32.mxu0 0.0
    %1198 = vmatmul.mubr.f32.gmra.mrb[0].mxu0 %v1104
    %v1199 = vpop.f32.mrb[0].mxu0
    %v1200 = vadd.f32 0.0, %v1199
    %v1201 = vpop.f32.mrb[0].mxu0
    %v1202 = vadd.f32 0.0, %v1201
    %1203 = vmatprep.mubr.f32.mxu0 0.0
    %1204 = vmatmul.mubr.f32.gmra.mrb[0].mxu0 %v1107
    %v1205 = vpop.f32.mrb[0].mxu0
    %v1206 = vadd.f32 0.0, %v1205
    %v1207 = vpop.f32.mrb[0].mxu0
    %v1208 = vadd.f32 0.0, %v1207
    %1209 = vmatprep.mubr.f32.mxu0 0.0
    %1210 = vmatmul.mubr.f32.gmra.mrb[0].mxu0 %v1110
    %v1211 = vpop.f32.mrb[0].mxu0
    %v1212 = vadd.f32 0.0, %v1211
    %v1213 = vpop.f32.mrb[0].mxu0
    %v1214 = vadd.f32 0.0, %v1213
    %1215 = vmatprep.mubr.f32.mxu0 0.0
    %1216 = vmatmul.mubr.f32.gmra.mrb[0].mxu0 %v1113
    %v1217 = vpop.f32.mrb[0].mxu0
    %v1218 = vadd.f32 0.0, %v1217
    %v1219 = vpop.f32.mrb[0].mxu0
    %v1220 = vadd.f32 0.0, %v1219
    %1221 = vmatprep.mubr.f32.mxu0 0.0
    %1222 = vmatmul.mubr.f32.gmra.mrb[0].mxu0 %v1116
    %v1223 = vpop.f32.mrb[0].mxu0
    %v1224 = vadd.f32 0.0, %v1223
    %v1225 = vpop.f32.mrb[0].mxu0
    %v1226 = vadd.f32 0.0, %v1225
    %1227 = vmatprep.mubr.f32.mxu0 0.0
    %1228 = vmatmul.mubr.f32.gmra.mrb[0].mxu0 %v1119
    %v1229 = vpop.f32.mrb[0].mxu0
    %v1230 = vadd.f32 0.0, %v1229
    %v1231 = vpop.f32.mrb[0].mxu0
    %v1232 = vadd.f32 0.0, %v1231
    %1233 = vmatprep.mubr.f32.mxu0 0.0
    %1234 = vmatmul.mubr.f32.gmra.mrb[0].mxu0 %v1122
    %v1235 = vpop.f32.mrb[0].mxu0
    %v1236 = vadd.f32 0.0, %v1235
    %v1237 = vpop.f32.mrb[0].mxu0
    %v1238 = vadd.f32 0.0, %v1237
    %1239 = vmatprep.mubr.f32.mxu0 0.0
    %1240 = vmatmul.mubr.f32.gmra.mrb[0].mxu0 %v1125
    %v1241 = vpop.f32.mrb[0].mxu0
    %v1242 = vadd.f32 0.0, %v1241
    %v1243 = vpop.f32.mrb[0].mxu0
    %v1244 = vadd.f32 0.0, %v1243
    %1245 = vmatprep.mubr.f32.mxu0 0.0
    %1246 = vmatmul.mubr.f32.gmra.mrb[0].mxu0 %v1128
    %v1247 = vpop.f32.mrb[0].mxu0
    %v1248 = vadd.f32 0.0, %v1247
    %v1249 = vpop.f32.mrb[0].mxu0
    %v1250 = vadd.f32 0.0, %v1249
    %1251 = vmatprep.mubr.f32.mxu0 0.0
    %1252 = vmatmul.mubr.f32.gmra.mrb[0].mxu0 %v1131
    %v1253 = vpop.f32.mrb[0].mxu0
    %v1254 = vadd.f32 0.0, %v1253
    %v1255 = vpop.f32.mrb[0].mxu0
    %v1256 = vadd.f32 0.0, %v1255
    %1257 = vdwg.mxu0
    %v1258 = vld [vmem:[%s8] sm:$0xff]
    %v1259 = vld [vmem:[%s8 + $0x8] sm:$0xff]
    %v1260 = vld [vmem:[%s8 + $0x10] sm:$0xff]
    %v1261 = vld [vmem:[%s8 + $0x18] sm:$0xff]
    %v1262 = vld [vmem:[%s8 + $0x20] sm:$0xff]
    %v1263 = vld [vmem:[%s8 + $0x28] sm:$0xff]
    %v1264 = vld [vmem:[%s8 + $0x30] sm:$0xff]
    %v1265 = vld [vmem:[%s8 + $0x38] sm:$0xff]
    %v1266 = vld [vmem:[%s8 + $0x40] sm:$0xff]
    %v1267 = vld [vmem:[%s8 + $0x48] sm:$0xff]
    %v1268 = vld [vmem:[%s8 + $0x50] sm:$0xff]
    %v1269 = vld [vmem:[%s8 + $0x58] sm:$0xff]
    %v1270 = vld [vmem:[%s8 + $0x60] sm:$0xff]
    %v1271 = vld [vmem:[%s8 + $0x68] sm:$0xff]
    %v1272 = vld [vmem:[%s8 + $0x70] sm:$0xff]
    %v1273 = vld [vmem:[%s8 + $0x78] sm:$0xff]
    %v1274 = vld [vmem:[%s8 + $0x80] sm:$0xff]
    %v1275 = vld [vmem:[%s8 + $0x88] sm:$0xff]
    %v1276 = vld [vmem:[%s8 + $0x90] sm:$0xff]
    %v1277 = vld [vmem:[%s8 + $0x98] sm:$0xff]
    %v1278 = vld [vmem:[%s8 + $0xa0] sm:$0xff]
    %v1279 = vld [vmem:[%s8 + $0xa8] sm:$0xff]
    %v1280 = vld [vmem:[%s8 + $0xb0] sm:$0xff]
    %v1281 = vld [vmem:[%s8 + $0xb8] sm:$0xff]
    %v1282 = vld [vmem:[%s8 + $0xc0] sm:$0xff]
    %v1283 = vld [vmem:[%s8 + $0xc8] sm:$0xff]
    %v1284 = vld [vmem:[%s8 + $0xd0] sm:$0xff]
    %v1285 = vld [vmem:[%s8 + $0xd8] sm:$0xff]
    %v1286 = vld [vmem:[%s8 + $0xe0] sm:$0xff]
    %v1287 = vld [vmem:[%s8 + $0xe8] sm:$0xff]
    %v1288 = vld [vmem:[%s8 + $0xf0] sm:$0xff]
    %v1289 = vld [vmem:[%s8 + $0xf8] sm:$0xff]
    %s1290 = scalar_lea.vmem %s7, 80
    %v1291 = vld [vmem:[%s1290] sm:$0xff]
    %v1292 = vld [vmem:[%s1290 + $0x8] sm:$0xff]
    %v1293 = vld [vmem:[%s1290 + $0x10] sm:$0xff]
    %v1294 = vld [vmem:[%s1290 + $0x18] sm:$0xff]
    %v1295 = vld [vmem:[%s1290 + $0x20] sm:$0xff]
    %v1296 = vld [vmem:[%s1290 + $0x28] sm:$0xff]
    %v1297 = vld [vmem:[%s1290 + $0x30] sm:$0xff]
    %v1298 = vld [vmem:[%s1290 + $0x38] sm:$0xff]
    %v1299 = vld [vmem:[%s1290 + $0x40] sm:$0xff]
    %v1300 = vld [vmem:[%s1290 + $0x48] sm:$0xff]
    %v1302 = vsel %vm1102, %v1291, 0
    %v1305 = vsel %vm1102, %v1292, 0
    %v1308 = vsel %vm1102, %v1293, 0
    %v1311 = vsel %vm1102, %v1294, 0
    %v1314 = vsel %vm1102, %v1295, 0
    %v1317 = vsel %vm1102, %v1296, 0
    %v1320 = vsel %vm1102, %v1297, 0
    %v1323 = vsel %vm1102, %v1298, 0
    %v1326 = vsel %vm1102, %v1299, 0
    %v1329 = vsel %vm1102, %v1300, 0
    %1331 = vmatprep.subr.mxu0 %v1089
    %1332 = vmatpush1.msra.mxu0 %v1088
    %1333 = vmatprep.subr.mxu0 %v1091
    %1334 = vmatpush1.msra.mxu0 %v1090
    %1335 = vmatprep.subr.mxu0 0.0
    %1336 = vmatpush1.msra.mxu0 0.0
    %1337 = vmatprep.subr.mxu0 0.0
    %1338 = vmatpush1.msra.mxu0 0.0
    %1339 = vmatprep.subr.mxu0 0.0
    %1340 = vmatpush1.msra.mxu0 0.0
    %1341 = vmatprep.subr.mxu0 0.0
    %1342 = vmatpush1.msra.mxu0 0.0
    %1343 = vmatprep.subr.mxu0 0.0
    %1344 = vmatpush1.msra.mxu0 0.0
    %1345 = vmatprep.subr.mxu0 0.0
    %1346 = vmatpush1.msra.mxu0 0.0
    %1347 = vmatprep.subr.mxu0 0.0
    %1348 = vmatpush1.msra.mxu0 0.0
    %1349 = vmatprep.subr.mxu0 0.0
    %1350 = vmatpush1.msra.mxu0 0.0
    %1351 = vmatprep.subr.mxu0 0.0
    %1352 = vmatpush1.msra.mxu0 0.0
    %1353 = vmatprep.subr.mxu0 0.0
    %1354 = vmatpush1.msra.mxu0 0.0
    %1355 = vmatprep.subr.mxu0 0.0
    %1356 = vmatpush1.msra.mxu0 0.0
    %1357 = vmatprep.subr.mxu0 0.0
    %1358 = vmatpush1.msra.mxu0 0.0
    %1359 = vmatprep.subr.mxu0 0.0
    %1360 = vmatpush1.msra.mxu0 0.0
    %1361 = vmatprep.subr.mxu0 0.0
    %1362 = vmatpush1.msra.mxu0 0.0
    %1363 = vmatprep.subr.mxu0 0.0
    %1364 = vmatpush1.msra.mxu0 0.0
    %1365 = vmatprep.subr.mxu0 0.0
    %1366 = vmatpush1.msra.mxu0 0.0
    %1367 = vmatprep.subr.mxu0 0.0
    %1368 = vmatpush1.msra.mxu0 0.0
    %1369 = vmatprep.subr.mxu0 0.0
    %1370 = vmatpush1.msra.mxu0 0.0
    %1371 = vmatprep.subr.mxu0 0.0
    %1372 = vmatpush1.msra.mxu0 0.0
    %1373 = vmatprep.subr.mxu0 0.0
    %1374 = vmatpush1.msra.mxu0 0.0
    %1375 = vmatprep.subr.mxu0 0.0
    %1376 = vmatpush1.msra.mxu0 0.0
    %1377 = vmatprep.subr.mxu0 0.0
    %1378 = vmatpush1.msra.mxu0 0.0
    %1379 = vmatprep.subr.mxu0 0.0
    %1380 = vmatpush1.msra.mxu0 0.0
    %1381 = vmatprep.subr.mxu0 0.0
    %1382 = vmatpush1.msra.mxu0 0.0
    %1383 = vmatprep.subr.mxu0 0.0
    %1384 = vmatpush1.msra.mxu0 0.0
    %1385 = vmatprep.subr.mxu0 0.0
    %1386 = vmatpush1.msra.mxu0 0.0
    %1387 = vmatprep.subr.mxu0 0.0
    %1388 = vmatpush1.msra.mxu0 0.0
    %1389 = vmatprep.subr.mxu0 0.0
    %1390 = vmatpush1.msra.mxu0 0.0
    %1391 = vmatprep.subr.mxu0 0.0
    %1392 = vmatpush1.msra.mxu0 0.0
    %1393 = vmatprep.subr.mxu0 0.0
    %1394 = vmatpush1.msra.mxu0 0.0
    %1395 = vmatprep.mubr.f32.mxu0 0.0
    %1396 = vmatmul.mubr.f32.gmra.mrb[0].mxu0 %v1302
    %v1397 = vpop.f32.mrb[0].mxu0
    %v1398 = vadd.f32 0.0, %v1397
    %v1399 = vpop.f32.mrb[0].mxu0
    %v1400 = vadd.f32 0.0, %v1399
    %1401 = vmatprep.mubr.f32.mxu0 0.0
    %1402 = vmatmul.mubr.f32.gmra.mrb[0].mxu0 %v1305
    %v1403 = vpop.f32.mrb[0].mxu0
    %v1404 = vadd.f32 0.0, %v1403
    %v1405 = vpop.f32.mrb[0].mxu0
    %v1406 = vadd.f32 0.0, %v1405
    %1407 = vmatprep.mubr.f32.mxu0 0.0
    %1408 = vmatmul.mubr.f32.gmra.mrb[0].mxu0 %v1308
    %v1409 = vpop.f32.mrb[0].mxu0
    %v1410 = vadd.f32 0.0, %v1409
    %v1411 = vpop.f32.mrb[0].mxu0
    %v1412 = vadd.f32 0.0, %v1411
    %1413 = vmatprep.mubr.f32.mxu0 0.0
    %1414 = vmatmul.mubr.f32.gmra.mrb[0].mxu0 %v1311
    %v1415 = vpop.f32.mrb[0].mxu0
    %v1416 = vadd.f32 0.0, %v1415
    %v1417 = vpop.f32.mrb[0].mxu0
    %v1418 = vadd.f32 0.0, %v1417
    %1419 = vmatprep.mubr.f32.mxu0 0.0
    %1420 = vmatmul.mubr.f32.gmra.mrb[0].mxu0 %v1314
    %v1421 = vpop.f32.mrb[0].mxu0
    %v1422 = vadd.f32 0.0, %v1421
    %v1423 = vpop.f32.mrb[0].mxu0
    %v1424 = vadd.f32 0.0, %v1423
    %1425 = vmatprep.mubr.f32.mxu0 0.0
    %1426 = vmatmul.mubr.f32.gmra.mrb[0].mxu0 %v1317
    %v1427 = vpop.f32.mrb[0].mxu0
    %v1428 = vadd.f32 0.0, %v1427
    %v1429 = vpop.f32.mrb[0].mxu0
    %v1430 = vadd.f32 0.0, %v1429
    %1431 = vmatprep.mubr.f32.mxu0 0.0
    %1432 = vmatmul.mubr.f32.gmra.mrb[0].mxu0 %v1320
    %v1433 = vpop.f32.mrb[0].mxu0
    %v1434 = vadd.f32 0.0, %v1433
    %v1435 = vpop.f32.mrb[0].mxu0
    %v1436 = vadd.f32 0.0, %v1435
    %1437 = vmatprep.mubr.f32.mxu0 0.0
    %1438 = vmatmul.mubr.f32.gmra.mrb[0].mxu0 %v1323
    %v1439 = vpop.f32.mrb[0].mxu0
    %v1440 = vadd.f32 0.0, %v1439
    %v1441 = vpop.f32.mrb[0].mxu0
    %v1442 = vadd.f32 0.0, %v1441
    %1443 = vmatprep.mubr.f32.mxu0 0.0
    %1444 = vmatmul.mubr.f32.gmra.mrb[0].mxu0 %v1326
    %v1445 = vpop.f32.mrb[0].mxu0
    %v1446 = vadd.f32 0.0, %v1445
    %v1447 = vpop.f32.mrb[0].mxu0
    %v1448 = vadd.f32 0.0, %v1447
    %1449 = vmatprep.mubr.f32.mxu0 0.0
    %1450 = vmatmul.mubr.f32.gmra.mrb[0].mxu0 %v1329
    %v1451 = vpop.f32.mrb[0].mxu0
    %v1452 = vadd.f32 0.0, %v1451
    %v1453 = vpop.f32.mrb[0].mxu0
    %v1454 = vadd.f32 0.0, %v1453
    %1455 = vdwg.mxu0
    %s1456 = scalar_lea.vmem %s8, 256
    %v1457 = vld [vmem:[%s1456] sm:$0xff]
    %v1458 = vld [vmem:[%s1456 + $0x8] sm:$0xff]
    %v1459 = vld [vmem:[%s1456 + $0x10] sm:$0xff]
    %v1460 = vld [vmem:[%s1456 + $0x18] sm:$0xff]
    %v1461 = vld [vmem:[%s1456 + $0x20] sm:$0xff]
    %v1462 = vld [vmem:[%s1456 + $0x28] sm:$0xff]
    %v1463 = vld [vmem:[%s1456 + $0x30] sm:$0xff]
    %v1464 = vld [vmem:[%s1456 + $0x38] sm:$0xff]
    %v1465 = vld [vmem:[%s1456 + $0x40] sm:$0xff]
    %v1466 = vld [vmem:[%s1456 + $0x48] sm:$0xff]
    %v1467 = vld [vmem:[%s1456 + $0x50] sm:$0xff]
    %v1468 = vld [vmem:[%s1456 + $0x58] sm:$0xff]
    %v1469 = vld [vmem:[%s1456 + $0x60] sm:$0xff]
    %v1470 = vld [vmem:[%s1456 + $0x68] sm:$0xff]
    %v1471 = vld [vmem:[%s1456 + $0x70] sm:$0xff]
    %v1472 = vld [vmem:[%s1456 + $0x78] sm:$0xff]
    %v1473 = vld [vmem:[%s1456 + $0x80] sm:$0xff]
    %v1474 = vld [vmem:[%s1456 + $0x88] sm:$0xff]
    %v1475 = vld [vmem:[%s1456 + $0x90] sm:$0xff]
    %v1476 = vld [vmem:[%s1456 + $0x98] sm:$0xff]
    %v1477 = vld [vmem:[%s1456 + $0xa0] sm:$0xff]
    %v1478 = vld [vmem:[%s1456 + $0xa8] sm:$0xff]
    %v1479 = vld [vmem:[%s1456 + $0xb0] sm:$0xff]
    %v1480 = vld [vmem:[%s1456 + $0xb8] sm:$0xff]
    %v1481 = vld [vmem:[%s1456 + $0xc0] sm:$0xff]
    %v1482 = vld [vmem:[%s1456 + $0xc8] sm:$0xff]
    %v1483 = vld [vmem:[%s1456 + $0xd0] sm:$0xff]
    %v1484 = vld [vmem:[%s1456 + $0xd8] sm:$0xff]
    %v1485 = vld [vmem:[%s1456 + $0xe0] sm:$0xff]
    %v1486 = vld [vmem:[%s1456 + $0xe8] sm:$0xff]
    %v1487 = vld [vmem:[%s1456 + $0xf0] sm:$0xff]
    %v1488 = vld [vmem:[%s1456 + $0xf8] sm:$0xff]
    %1489 = vmatprep.subr.mxu0 0.0
    %1490 = vmatpush1.msra.mxu0 %v1457
    %1491 = vmatprep.subr.mxu0 0.0
    %1492 = vmatpush1.msra.mxu0 %v1458
    %1493 = vmatprep.subr.mxu0 0.0
    %1494 = vmatpush1.msra.mxu0 %v1459
    %1495 = vmatprep.subr.mxu0 0.0
    %1496 = vmatpush1.msra.mxu0 %v1460
    %1497 = vmatprep.subr.mxu0 0.0
    %1498 = vmatpush1.msra.mxu0 %v1461
    %1499 = vmatprep.subr.mxu0 0.0
    %1500 = vmatpush1.msra.mxu0 %v1462
    %1501 = vmatprep.subr.mxu0 0.0
    %1502 = vmatpush1.msra.mxu0 %v1463
    %1503 = vmatprep.subr.mxu0 0.0
    %1504 = vmatpush1.msra.mxu0 %v1464
    %1505 = vmatprep.subr.mxu0 0.0
    %1506 = vmatpush1.msra.mxu0 %v1465
    %1507 = vmatprep.subr.mxu0 0.0
    %1508 = vmatpush1.msra.mxu0 %v1466
    %1509 = vmatprep.subr.mxu0 0.0
    %1510 = vmatpush1.msra.mxu0 %v1467
    %1511 = vmatprep.subr.mxu0 0.0
    %1512 = vmatpush1.msra.mxu0 %v1468
    %1513 = vmatprep.subr.mxu0 0.0
    %1514 = vmatpush1.msra.mxu0 %v1469
    %1515 = vmatprep.subr.mxu0 0.0
    %1516 = vmatpush1.msra.mxu0 %v1470
    %1517 = vmatprep.subr.mxu0 0.0
    %1518 = vmatpush1.msra.mxu0 %v1471
    %1519 = vmatprep.subr.mxu0 0.0
    %1520 = vmatpush1.msra.mxu0 %v1472
    %1521 = vmatprep.subr.mxu0 0.0
    %1522 = vmatpush1.msra.mxu0 %v1473
    %1523 = vmatprep.subr.mxu0 0.0
    %1524 = vmatpush1.msra.mxu0 %v1474
    %1525 = vmatprep.subr.mxu0 0.0
    %1526 = vmatpush1.msra.mxu0 %v1475
    %1527 = vmatprep.subr.mxu0 0.0
    %1528 = vmatpush1.msra.mxu0 %v1476
    %1529 = vmatprep.subr.mxu0 0.0
    %1530 = vmatpush1.msra.mxu0 %v1477
    %1531 = vmatprep.subr.mxu0 0.0
    %1532 = vmatpush1.msra.mxu0 %v1478
    %1533 = vmatprep.subr.mxu0 0.0
    %1534 = vmatpush1.msra.mxu0 %v1479
    %1535 = vmatprep.subr.mxu0 0.0
    %1536 = vmatpush1.msra.mxu0 %v1480
    %1537 = vmatprep.subr.mxu0 0.0
    %1538 = vmatpush1.msra.mxu0 %v1481
    %1539 = vmatprep.subr.mxu0 0.0
    %1540 = vmatpush1.msra.mxu0 %v1482
    %1541 = vmatprep.subr.mxu0 0.0
    %1542 = vmatpush1.msra.mxu0 %v1483
    %1543 = vmatprep.subr.mxu0 0.0
    %1544 = vmatpush1.msra.mxu0 %v1484
    %1545 = vmatprep.subr.mxu0 0.0
    %1546 = vmatpush1.msra.mxu0 %v1485
    %1547 = vmatprep.subr.mxu0 0.0
    %1548 = vmatpush1.msra.mxu0 %v1486
    %1549 = vmatprep.subr.mxu0 0.0
    %1550 = vmatpush1.msra.mxu0 %v1487
    %1551 = vmatprep.subr.mxu0 0.0
    %1552 = vmatpush1.msra.mxu0 %v1488
    %1553 = vmatprep.mubr.f32.mxu0 %v1400
    %1554 = vmatmul.mubr.f32.gmra.mrb[0].mxu0 %v1398
    %v1555 = vpop.f32.mrb[0].mxu0
    %v1556 = vadd.f32 0.0, %v1555
    %v1557 = vpop.f32.mrb[0].mxu0
    %1558 = vmatprep.mubr.f32.mxu0 %v1406
    %1559 = vmatmul.mubr.f32.gmra.mrb[0].mxu0 %v1404
    %v1560 = vpop.f32.mrb[0].mxu0
    %v1561 = vadd.f32 0.0, %v1560
    %v1562 = vpop.f32.mrb[0].mxu0
    %1563 = vmatprep.mubr.f32.mxu0 %v1412
    %1564 = vmatmul.mubr.f32.gmra.mrb[0].mxu0 %v1410
    %v1565 = vpop.f32.mrb[0].mxu0
    %v1566 = vadd.f32 0.0, %v1565
    %v1567 = vpop.f32.mrb[0].mxu0
    %1568 = vmatprep.mubr.f32.mxu0 %v1418
    %1569 = vmatmul.mubr.f32.gmra.mrb[0].mxu0 %v1416
    %v1570 = vpop.f32.mrb[0].mxu0
    %v1571 = vadd.f32 0.0, %v1570
    %v1572 = vpop.f32.mrb[0].mxu0
    %1573 = vmatprep.mubr.f32.mxu0 %v1424
    %1574 = vmatmul.mubr.f32.gmra.mrb[0].mxu0 %v1422
    %v1575 = vpop.f32.mrb[0].mxu0
    %v1576 = vadd.f32 0.0, %v1575
    %v1577 = vpop.f32.mrb[0].mxu0
    %1578 = vmatprep.mubr.f32.mxu0 %v1430
    %1579 = vmatmul.mubr.f32.gmra.mrb[0].mxu0 %v1428
    %v1580 = vpop.f32.mrb[0].mxu0
    %v1581 = vadd.f32 0.0, %v1580
    %v1582 = vpop.f32.mrb[0].mxu0
    %1583 = vmatprep.mubr.f32.mxu0 %v1436
    %1584 = vmatmul.mubr.f32.gmra.mrb[0].mxu0 %v1434
    %v1585 = vpop.f32.mrb[0].mxu0
    %v1586 = vadd.f32 0.0, %v1585
    %v1587 = vpop.f32.mrb[0].mxu0
    %1588 = vmatprep.mubr.f32.mxu0 %v1442
    %1589 = vmatmul.mubr.f32.gmra.mrb[0].mxu0 %v1440
    %v1590 = vpop.f32.mrb[0].mxu0
    %v1591 = vadd.f32 0.0, %v1590
    %v1592 = vpop.f32.mrb[0].mxu0
    %1593 = vmatprep.mubr.f32.mxu0 %v1448
    %1594 = vmatmul.mubr.f32.gmra.mrb[0].mxu0 %v1446
    %v1595 = vpop.f32.mrb[0].mxu0
    %v1596 = vadd.f32 0.0, %v1595
    %v1597 = vpop.f32.mrb[0].mxu0
    %1598 = vmatprep.mubr.f32.mxu0 %v1454
    %1599 = vmatmul.mubr.f32.gmra.mrb[0].mxu0 %v1452
    %v1600 = vpop.f32.mrb[0].mxu0
    %v1601 = vadd.f32 0.0, %v1600
    %v1602 = vpop.f32.mrb[0].mxu0
    %1603 = vdwg.mxu0
    %1604 = vmatprep.subr.mxu0 0.0
    %1605 = vmatpush1.msra.mxu0 %v1258
    %1606 = vmatprep.subr.mxu0 0.0
    %1607 = vmatpush1.msra.mxu0 %v1259
    %1608 = vmatprep.subr.mxu0 0.0
    %1609 = vmatpush1.msra.mxu0 %v1260
    %1610 = vmatprep.subr.mxu0 0.0
    %1611 = vmatpush1.msra.mxu0 %v1261
    %1612 = vmatprep.subr.mxu0 0.0
    %1613 = vmatpush1.msra.mxu0 %v1262
    %1614 = vmatprep.subr.mxu0 0.0
    %1615 = vmatpush1.msra.mxu0 %v1263
    %1616 = vmatprep.subr.mxu0 0.0
    %1617 = vmatpush1.msra.mxu0 %v1264
    %1618 = vmatprep.subr.mxu0 0.0
    %1619 = vmatpush1.msra.mxu0 %v1265
    %1620 = vmatprep.subr.mxu0 0.0
    %1621 = vmatpush1.msra.mxu0 %v1266
    %1622 = vmatprep.subr.mxu0 0.0
    %1623 = vmatpush1.msra.mxu0 %v1267
    %1624 = vmatprep.subr.mxu0 0.0
    %1625 = vmatpush1.msra.mxu0 %v1268
    %1626 = vmatprep.subr.mxu0 0.0
    %1627 = vmatpush1.msra.mxu0 %v1269
    %1628 = vmatprep.subr.mxu0 0.0
    %1629 = vmatpush1.msra.mxu0 %v1270
    %1630 = vmatprep.subr.mxu0 0.0
    %1631 = vmatpush1.msra.mxu0 %v1271
    %1632 = vmatprep.subr.mxu0 0.0
    %1633 = vmatpush1.msra.mxu0 %v1272
    %1634 = vmatprep.subr.mxu0 0.0
    %1635 = vmatpush1.msra.mxu0 %v1273
    %1636 = vmatprep.subr.mxu0 0.0
    %1637 = vmatpush1.msra.mxu0 %v1274
    %1638 = vmatprep.subr.mxu0 0.0
    %1639 = vmatpush1.msra.mxu0 %v1275
    %1640 = vmatprep.subr.mxu0 0.0
    %1641 = vmatpush1.msra.mxu0 %v1276
    %1642 = vmatprep.subr.mxu0 0.0
    %1643 = vmatpush1.msra.mxu0 %v1277
    %1644 = vmatprep.subr.mxu0 0.0
    %1645 = vmatpush1.msra.mxu0 %v1278
    %1646 = vmatprep.subr.mxu0 0.0
    %1647 = vmatpush1.msra.mxu0 %v1279
    %1648 = vmatprep.subr.mxu0 0.0
    %1649 = vmatpush1.msra.mxu0 %v1280
    %1650 = vmatprep.subr.mxu0 0.0
    %1651 = vmatpush1.msra.mxu0 %v1281
    %1652 = vmatprep.subr.mxu0 0.0
    %1653 = vmatpush1.msra.mxu0 %v1282
    %1654 = vmatprep.subr.mxu0 0.0
    %1655 = vmatpush1.msra.mxu0 %v1283
    %1656 = vmatprep.subr.mxu0 0.0
    %1657 = vmatpush1.msra.mxu0 %v1284
    %1658 = vmatprep.subr.mxu0 0.0
    %1659 = vmatpush1.msra.mxu0 %v1285
    %1660 = vmatprep.subr.mxu0 0.0
    %1661 = vmatpush1.msra.mxu0 %v1286
    %1662 = vmatprep.subr.mxu0 0.0
    %1663 = vmatpush1.msra.mxu0 %v1287
    %1664 = vmatprep.subr.mxu0 0.0
    %1665 = vmatpush1.msra.mxu0 %v1288
    %1666 = vmatprep.subr.mxu0 0.0
    %1667 = vmatpush1.msra.mxu0 %v1289
    %1668 = vmatprep.mubr.f32.mxu0 %v1202
    %1669 = vmatmul.mubr.f32.gmra.mrb[0].mxu0 %v1200
    %v1670 = vpop.f32.mrb[0].mxu0
    %v1671 = vadd.f32 %v1556, %v1670
    %v1672 = vpop.f32.mrb[0].mxu0
    %1673 = vmatprep.mubr.f32.mxu0 %v1208
    %1674 = vmatmul.mubr.f32.gmra.mrb[0].mxu0 %v1206
    %v1675 = vpop.f32.mrb[0].mxu0
    %v1676 = vadd.f32 %v1561, %v1675
    %v1677 = vpop.f32.mrb[0].mxu0
    %1678 = vmatprep.mubr.f32.mxu0 %v1214
    %1679 = vmatmul.mubr.f32.gmra.mrb[0].mxu0 %v1212
    %v1680 = vpop.f32.mrb[0].mxu0
    %v1681 = vadd.f32 %v1566, %v1680
    %v1682 = vpop.f32.mrb[0].mxu0
    %1683 = vmatprep.mubr.f32.mxu0 %v1220
    %1684 = vmatmul.mubr.f32.gmra.mrb[0].mxu0 %v1218
    %v1685 = vpop.f32.mrb[0].mxu0
    %v1686 = vadd.f32 %v1571, %v1685
    %v1687 = vpop.f32.mrb[0].mxu0
    %1688 = vmatprep.mubr.f32.mxu0 %v1226
    %1689 = vmatmul.mubr.f32.gmra.mrb[0].mxu0 %v1224
    %v1690 = vpop.f32.mrb[0].mxu0
    %v1691 = vadd.f32 %v1576, %v1690
    %v1692 = vpop.f32.mrb[0].mxu0
    %1693 = vmatprep.mubr.f32.mxu0 %v1232
    %1694 = vmatmul.mubr.f32.gmra.mrb[0].mxu0 %v1230
    %v1695 = vpop.f32.mrb[0].mxu0
    %v1696 = vadd.f32 %v1581, %v1695
    %v1697 = vpop.f32.mrb[0].mxu0
    %1698 = vmatprep.mubr.f32.mxu0 %v1238
    %1699 = vmatmul.mubr.f32.gmra.mrb[0].mxu0 %v1236
    %v1700 = vpop.f32.mrb[0].mxu0
    %v1701 = vadd.f32 %v1586, %v1700
    %v1702 = vpop.f32.mrb[0].mxu0
    %1703 = vmatprep.mubr.f32.mxu0 %v1244
    %1704 = vmatmul.mubr.f32.gmra.mrb[0].mxu0 %v1242
    %v1705 = vpop.f32.mrb[0].mxu0
    %v1706 = vadd.f32 %v1591, %v1705
    %v1707 = vpop.f32.mrb[0].mxu0
    %1708 = vmatprep.mubr.f32.mxu0 %v1250
    %1709 = vmatmul.mubr.f32.gmra.mrb[0].mxu0 %v1248
    %v1710 = vpop.f32.mrb[0].mxu0
    %v1711 = vadd.f32 %v1596, %v1710
    %v1712 = vpop.f32.mrb[0].mxu0
    %1713 = vmatprep.mubr.f32.mxu0 %v1256
    %1714 = vmatmul.mubr.f32.gmra.mrb[0].mxu0 %v1254
    %v1715 = vpop.f32.mrb[0].mxu0
    %v1716 = vadd.f32 %v1601, %v1715
    %v1717 = vpop.f32.mrb[0].mxu0
    %1718 = vdwg.mxu0
    %s1719 = scalar_lea.vmem %s7, 160
    %v1720 = vld [vmem:[%s1719] sm:$0xff]
    %v1721 = vld [vmem:[%s1719 + $0x8] sm:$0xff]
    %v1722 = vld [vmem:[%s1719 + $0x10] sm:$0xff]
    %v1723 = vld [vmem:[%s1719 + $0x18] sm:$0xff]
    %v1724 = vld [vmem:[%s1719 + $0x20] sm:$0xff]
    %v1725 = vld [vmem:[%s1719 + $0x28] sm:$0xff]
    %v1726 = vld [vmem:[%s1719 + $0x30] sm:$0xff]
    %v1727 = vld [vmem:[%s1719 + $0x38] sm:$0xff]
    %v1728 = vld [vmem:[%s1719 + $0x40] sm:$0xff]
    %v1729 = vld [vmem:[%s1719 + $0x48] sm:$0xff]
    %v1731 = vsel %vm1102, %v1720, 0
    %v1734 = vsel %vm1102, %v1721, 0
    %v1737 = vsel %vm1102, %v1722, 0
    %v1740 = vsel %vm1102, %v1723, 0
    %v1743 = vsel %vm1102, %v1724, 0
    %v1746 = vsel %vm1102, %v1725, 0
    %v1749 = vsel %vm1102, %v1726, 0
    %v1752 = vsel %vm1102, %v1727, 0
    %v1755 = vsel %vm1102, %v1728, 0
    %v1758 = vsel %vm1102, %v1729, 0
    %1760 = vmatprep.subr.mxu0 %v1089
    %1761 = vmatpush1.msra.mxu0 %v1088
    %1762 = vmatprep.subr.mxu0 %v1091
    %1763 = vmatpush1.msra.mxu0 %v1090
    %1764 = vmatprep.subr.mxu0 0.0
    %1765 = vmatpush1.msra.mxu0 0.0
    %1766 = vmatprep.subr.mxu0 0.0
    %1767 = vmatpush1.msra.mxu0 0.0
    %1768 = vmatprep.subr.mxu0 0.0
    %1769 = vmatpush1.msra.mxu0 0.0
    %1770 = vmatprep.subr.mxu0 0.0
    %1771 = vmatpush1.msra.mxu0 0.0
    %1772 = vmatprep.subr.mxu0 0.0
    %1773 = vmatpush1.msra.mxu0 0.0
    %1774 = vmatprep.subr.mxu0 0.0
    %1775 = vmatpush1.msra.mxu0 0.0
    %1776 = vmatprep.subr.mxu0 0.0
    %1777 = vmatpush1.msra.mxu0 0.0
    %1778 = vmatprep.subr.mxu0 0.0
    %1779 = vmatpush1.msra.mxu0 0.0
    %1780 = vmatprep.subr.mxu0 0.0
    %1781 = vmatpush1.msra.mxu0 0.0
    %1782 = vmatprep.subr.mxu0 0.0
    %1783 = vmatpush1.msra.mxu0 0.0
    %1784 = vmatprep.subr.mxu0 0.0
    %1785 = vmatpush1.msra.mxu0 0.0
    %1786 = vmatprep.subr.mxu0 0.0
    %1787 = vmatpush1.msra.mxu0 0.0
    %1788 = vmatprep.subr.mxu0 0.0
    %1789 = vmatpush1.msra.mxu0 0.0
    %1790 = vmatprep.subr.mxu0 0.0
    %1791 = vmatpush1.msra.mxu0 0.0
    %1792 = vmatprep.subr.mxu0 0.0
    %1793 = vmatpush1.msra.mxu0 0.0
    %1794 = vmatprep.subr.mxu0 0.0
    %1795 = vmatpush1.msra.mxu0 0.0
    %1796 = vmatprep.subr.mxu0 0.0
    %1797 = vmatpush1.msra.mxu0 0.0
    %1798 = vmatprep.subr.mxu0 0.0
    %1799 = vmatpush1.msra.mxu0 0.0
    %1800 = vmatprep.subr.mxu0 0.0
    %1801 = vmatpush1.msra.mxu0 0.0
    %1802 = vmatprep.subr.mxu0 0.0
    %1803 = vmatpush1.msra.mxu0 0.0
    %1804 = vmatprep.subr.mxu0 0.0
    %1805 = vmatpush1.msra.mxu0 0.0
    %1806 = vmatprep.subr.mxu0 0.0
    %1807 = vmatpush1.msra.mxu0 0.0
    %1808 = vmatprep.subr.mxu0 0.0
    %1809 = vmatpush1.msra.mxu0 0.0
    %1810 = vmatprep.subr.mxu0 0.0
    %1811 = vmatpush1.msra.mxu0 0.0
    %1812 = vmatprep.subr.mxu0 0.0
    %1813 = vmatpush1.msra.mxu0 0.0
    %1814 = vmatprep.subr.mxu0 0.0
    %1815 = vmatpush1.msra.mxu0 0.0
    %1816 = vmatprep.subr.mxu0 0.0
    %1817 = vmatpush1.msra.mxu0 0.0
    %1818 = vmatprep.subr.mxu0 0.0
    %1819 = vmatpush1.msra.mxu0 0.0
    %1820 = vmatprep.subr.mxu0 0.0
    %1821 = vmatpush1.msra.mxu0 0.0
    %1822 = vmatprep.subr.mxu0 0.0
    %1823 = vmatpush1.msra.mxu0 0.0
    %1824 = vmatprep.mubr.f32.mxu0 0.0
    %1825 = vmatmul.mubr.f32.gmra.mrb[0].mxu0 %v1731
    %v1826 = vpop.f32.mrb[0].mxu0
    %v1827 = vadd.f32 0.0, %v1826
    %v1828 = vpop.f32.mrb[0].mxu0
    %v1829 = vadd.f32 0.0, %v1828
    %1830 = vmatprep.mubr.f32.mxu0 0.0
    %1831 = vmatmul.mubr.f32.gmra.mrb[0].mxu0 %v1734
    %v1832 = vpop.f32.mrb[0].mxu0
    %v1833 = vadd.f32 0.0, %v1832
    %v1834 = vpop.f32.mrb[0].mxu0
    %v1835 = vadd.f32 0.0, %v1834
    %1836 = vmatprep.mubr.f32.mxu0 0.0
    %1837 = vmatmul.mubr.f32.gmra.mrb[0].mxu0 %v1737
    %v1838 = vpop.f32.mrb[0].mxu0
    %v1839 = vadd.f32 0.0, %v1838
    %v1840 = vpop.f32.mrb[0].mxu0
    %v1841 = vadd.f32 0.0, %v1840
    %1842 = vmatprep.mubr.f32.mxu0 0.0
    %1843 = vmatmul.mubr.f32.gmra.mrb[0].mxu0 %v1740
    %v1844 = vpop.f32.mrb[0].mxu0
    %v1845 = vadd.f32 0.0, %v1844
    %v1846 = vpop.f32.mrb[0].mxu0
    %v1847 = vadd.f32 0.0, %v1846
    %1848 = vmatprep.mubr.f32.mxu0 0.0
    %1849 = vmatmul.mubr.f32.gmra.mrb[0].mxu0 %v1743
    %v1850 = vpop.f32.mrb[0].mxu0
    %v1851 = vadd.f32 0.0, %v1850
    %v1852 = vpop.f32.mrb[0].mxu0
    %v1853 = vadd.f32 0.0, %v1852
    %1854 = vmatprep.mubr.f32.mxu0 0.0
    %1855 = vmatmul.mubr.f32.gmra.mrb[0].mxu0 %v1746
    %v1856 = vpop.f32.mrb[0].mxu0
    %v1857 = vadd.f32 0.0, %v1856
    %v1858 = vpop.f32.mrb[0].mxu0
    %v1859 = vadd.f32 0.0, %v1858
    %1860 = vmatprep.mubr.f32.mxu0 0.0
    %1861 = vmatmul.mubr.f32.gmra.mrb[0].mxu0 %v1749
    %v1862 = vpop.f32.mrb[0].mxu0
    %v1863 = vadd.f32 0.0, %v1862
    %v1864 = vpop.f32.mrb[0].mxu0
    %v1865 = vadd.f32 0.0, %v1864
    %1866 = vmatprep.mubr.f32.mxu0 0.0
    %1867 = vmatmul.mubr.f32.gmra.mrb[0].mxu0 %v1752
    %v1868 = vpop.f32.mrb[0].mxu0
    %v1869 = vadd.f32 0.0, %v1868
    %v1870 = vpop.f32.mrb[0].mxu0
    %v1871 = vadd.f32 0.0, %v1870
    %1872 = vmatprep.mubr.f32.mxu0 0.0
    %1873 = vmatmul.mubr.f32.gmra.mrb[0].mxu0 %v1755
    %v1874 = vpop.f32.mrb[0].mxu0
    %v1875 = vadd.f32 0.0, %v1874
    %v1876 = vpop.f32.mrb[0].mxu0
    %v1877 = vadd.f32 0.0, %v1876
    %1878 = vmatprep.mubr.f32.mxu0 0.0
    %1879 = vmatmul.mubr.f32.gmra.mrb[0].mxu0 %v1758
    %v1880 = vpop.f32.mrb[0].mxu0
    %v1881 = vadd.f32 0.0, %v1880
    %v1882 = vpop.f32.mrb[0].mxu0
    %v1883 = vadd.f32 0.0, %v1882
    %1884 = vdwg.mxu0
    %s1885 = scalar_lea.vmem %s8, 512
    %v1886 = vld [vmem:[%s1885] sm:$0xff]
    %v1887 = vld [vmem:[%s1885 + $0x8] sm:$0xff]
    %v1888 = vld [vmem:[%s1885 + $0x10] sm:$0xff]
    %v1889 = vld [vmem:[%s1885 + $0x18] sm:$0xff]
    %v1890 = vld [vmem:[%s1885 + $0x20] sm:$0xff]
    %v1891 = vld [vmem:[%s1885 + $0x28] sm:$0xff]
    %v1892 = vld [vmem:[%s1885 + $0x30] sm:$0xff]
    %v1893 = vld [vmem:[%s1885 + $0x38] sm:$0xff]
    %v1894 = vld [vmem:[%s1885 + $0x40] sm:$0xff]
    %v1895 = vld [vmem:[%s1885 + $0x48] sm:$0xff]
    %v1896 = vld [vmem:[%s1885 + $0x50] sm:$0xff]
    %v1897 = vld [vmem:[%s1885 + $0x58] sm:$0xff]
    %v1898 = vld [vmem:[%s1885 + $0x60] sm:$0xff]
    %v1899 = vld [vmem:[%s1885 + $0x68] sm:$0xff]
    %v1900 = vld [vmem:[%s1885 + $0x70] sm:$0xff]
    %v1901 = vld [vmem:[%s1885 + $0x78] sm:$0xff]
    %v1902 = vld [vmem:[%s1885 + $0x80] sm:$0xff]
    %v1903 = vld [vmem:[%s1885 + $0x88] sm:$0xff]
    %v1904 = vld [vmem:[%s1885 + $0x90] sm:$0xff]
    %v1905 = vld [vmem:[%s1885 + $0x98] sm:$0xff]
    %v1906 = vld [vmem:[%s1885 + $0xa0] sm:$0xff]
    %v1907 = vld [vmem:[%s1885 + $0xa8] sm:$0xff]
    %v1908 = vld [vmem:[%s1885 + $0xb0] sm:$0xff]
    %v1909 = vld [vmem:[%s1885 + $0xb8] sm:$0xff]
    %v1910 = vld [vmem:[%s1885 + $0xc0] sm:$0xff]
    %v1911 = vld [vmem:[%s1885 + $0xc8] sm:$0xff]
    %v1912 = vld [vmem:[%s1885 + $0xd0] sm:$0xff]
    %v1913 = vld [vmem:[%s1885 + $0xd8] sm:$0xff]
    %v1914 = vld [vmem:[%s1885 + $0xe0] sm:$0xff]
    %v1915 = vld [vmem:[%s1885 + $0xe8] sm:$0xff]
    %v1916 = vld [vmem:[%s1885 + $0xf0] sm:$0xff]
    %v1917 = vld [vmem:[%s1885 + $0xf8] sm:$0xff]
    %1918 = vmatprep.subr.mxu0 0.0
    %1919 = vmatpush1.msra.mxu0 %v1886
    %1920 = vmatprep.subr.mxu0 0.0
    %1921 = vmatpush1.msra.mxu0 %v1887
    %1922 = vmatprep.subr.mxu0 0.0
    %1923 = vmatpush1.msra.mxu0 %v1888
    %1924 = vmatprep.subr.mxu0 0.0
    %1925 = vmatpush1.msra.mxu0 %v1889
    %1926 = vmatprep.subr.mxu0 0.0
    %1927 = vmatpush1.msra.mxu0 %v1890
    %1928 = vmatprep.subr.mxu0 0.0
    %1929 = vmatpush1.msra.mxu0 %v1891
    %1930 = vmatprep.subr.mxu0 0.0
    %1931 = vmatpush1.msra.mxu0 %v1892
    %1932 = vmatprep.subr.mxu0 0.0
    %1933 = vmatpush1.msra.mxu0 %v1893
    %1934 = vmatprep.subr.mxu0 0.0
    %1935 = vmatpush1.msra.mxu0 %v1894
    %1936 = vmatprep.subr.mxu0 0.0
    %1937 = vmatpush1.msra.mxu0 %v1895
    %1938 = vmatprep.subr.mxu0 0.0
    %1939 = vmatpush1.msra.mxu0 %v1896
    %1940 = vmatprep.subr.mxu0 0.0
    %1941 = vmatpush1.msra.mxu0 %v1897
    %1942 = vmatprep.subr.mxu0 0.0
    %1943 = vmatpush1.msra.mxu0 %v1898
    %1944 = vmatprep.subr.mxu0 0.0
    %1945 = vmatpush1.msra.mxu0 %v1899
    %1946 = vmatprep.subr.mxu0 0.0
    %1947 = vmatpush1.msra.mxu0 %v1900
    %1948 = vmatprep.subr.mxu0 0.0
    %1949 = vmatpush1.msra.mxu0 %v1901
    %1950 = vmatprep.subr.mxu0 0.0
    %1951 = vmatpush1.msra.mxu0 %v1902
    %1952 = vmatprep.subr.mxu0 0.0
    %1953 = vmatpush1.msra.mxu0 %v1903
    %1954 = vmatprep.subr.mxu0 0.0
    %1955 = vmatpush1.msra.mxu0 %v1904
    %1956 = vmatprep.subr.mxu0 0.0
    %1957 = vmatpush1.msra.mxu0 %v1905
    %1958 = vmatprep.subr.mxu0 0.0
    %1959 = vmatpush1.msra.mxu0 %v1906
    %1960 = vmatprep.subr.mxu0 0.0
    %1961 = vmatpush1.msra.mxu0 %v1907
    %1962 = vmatprep.subr.mxu0 0.0
    %1963 = vmatpush1.msra.mxu0 %v1908
    %1964 = vmatprep.subr.mxu0 0.0
    %1965 = vmatpush1.msra.mxu0 %v1909
    %1966 = vmatprep.subr.mxu0 0.0
    %1967 = vmatpush1.msra.mxu0 %v1910
    %1968 = vmatprep.subr.mxu0 0.0
    %1969 = vmatpush1.msra.mxu0 %v1911
    %1970 = vmatprep.subr.mxu0 0.0
    %1971 = vmatpush1.msra.mxu0 %v1912
    %1972 = vmatprep.subr.mxu0 0.0
    %1973 = vmatpush1.msra.mxu0 %v1913
    %1974 = vmatprep.subr.mxu0 0.0
    %1975 = vmatpush1.msra.mxu0 %v1914
    %1976 = vmatprep.subr.mxu0 0.0
    %1977 = vmatpush1.msra.mxu0 %v1915
    %1978 = vmatprep.subr.mxu0 0.0
    %1979 = vmatpush1.msra.mxu0 %v1916
    %1980 = vmatprep.subr.mxu0 0.0
    %1981 = vmatpush1.msra.mxu0 %v1917
    %1982 = vmatprep.mubr.f32.mxu0 %v1829
    %1983 = vmatmul.mubr.f32.gmra.mrb[0].mxu0 %v1827
    %v1984 = vpop.f32.mrb[0].mxu0
    %v1985 = vadd.f32 0.0, %v1984
    %v1986 = vpop.f32.mrb[0].mxu0
    %1987 = vmatprep.mubr.f32.mxu0 %v1835
    %1988 = vmatmul.mubr.f32.gmra.mrb[0].mxu0 %v1833
    %v1989 = vpop.f32.mrb[0].mxu0
    %v1990 = vadd.f32 0.0, %v1989
    %v1991 = vpop.f32.mrb[0].mxu0
    %1992 = vmatprep.mubr.f32.mxu0 %v1841
    %1993 = vmatmul.mubr.f32.gmra.mrb[0].mxu0 %v1839
    %v1994 = vpop.f32.mrb[0].mxu0
    %v1995 = vadd.f32 0.0, %v1994
    %v1996 = vpop.f32.mrb[0].mxu0
    %1997 = vmatprep.mubr.f32.mxu0 %v1847
    %1998 = vmatmul.mubr.f32.gmra.mrb[0].mxu0 %v1845
    %v1999 = vpop.f32.mrb[0].mxu0
    %v2000 = vadd.f32 0.0, %v1999
    %v2001 = vpop.f32.mrb[0].mxu0
    %2002 = vmatprep.mubr.f32.mxu0 %v1853
    %2003 = vmatmul.mubr.f32.gmra.mrb[0].mxu0 %v1851
    %v2004 = vpop.f32.mrb[0].mxu0
    %v2005 = vadd.f32 0.0, %v2004
    %v2006 = vpop.f32.mrb[0].mxu0
    %2007 = vmatprep.mubr.f32.mxu0 %v1859
    %2008 = vmatmul.mubr.f32.gmra.mrb[0].mxu0 %v1857
    %v2009 = vpop.f32.mrb[0].mxu0
    %v2010 = vadd.f32 0.0, %v2009
    %v2011 = vpop.f32.mrb[0].mxu0
    %2012 = vmatprep.mubr.f32.mxu0 %v1865
    %2013 = vmatmul.mubr.f32.gmra.mrb[0].mxu0 %v1863
    %v2014 = vpop.f32.mrb[0].mxu0
    %v2015 = vadd.f32 0.0, %v2014
    %v2016 = vpop.f32.mrb[0].mxu0
    %2017 = vmatprep.mubr.f32.mxu0 %v1871
    %2018 = vmatmul.mubr.f32.gmra.mrb[0].mxu0 %v1869
    %v2019 = vpop.f32.mrb[0].mxu0
    %v2020 = vadd.f32 0.0, %v2019
    %v2021 = vpop.f32.mrb[0].mxu0
    %2022 = vmatprep.mubr.f32.mxu0 %v1877
    %2023 = vmatmul.mubr.f32.gmra.mrb[0].mxu0 %v1875
    %v2024 = vpop.f32.mrb[0].mxu0
    %v2025 = vadd.f32 0.0, %v2024
    %v2026 = vpop.f32.mrb[0].mxu0
    %2027 = vmatprep.mubr.f32.mxu0 %v1883
    %2028 = vmatmul.mubr.f32.gmra.mrb[0].mxu0 %v1881
    %v2029 = vpop.f32.mrb[0].mxu0
    %v2030 = vadd.f32 0.0, %v2029
    %v2031 = vpop.f32.mrb[0].mxu0
    %2032 = vdwg.mxu0
    %v2033 = vadd.f32 %v1671, %v1985
    %v2034 = vadd.f32 %v1676, %v1990
    %v2035 = vadd.f32 %v1681, %v1995
    %v2036 = vadd.f32 %v1686, %v2000
    %v2037 = vadd.f32 %v1691, %v2005
    %v2038 = vadd.f32 %v1696, %v2010
    %v2039 = vadd.f32 %v1701, %v2015
    %v2040 = vadd.f32 %v1706, %v2020
    %v2041 = vadd.f32 %v1711, %v2025
    %v2042 = vadd.f32 %v1716, %v2030
    %v2043 = vld [vmem:[%s9] sm:$0x1]
    %v2045 = vlaneseq
    %v2046 = vshrl.u32 %v2045, 7
    %v2047 = vsub.s32 0, %v2046
    %v2048 = vrot.slane %v2043, %v2047
    %v2050 = vadd.f32 %v2033, %v2048
    %v2051 = vadd.f32 %v2034, %v2048
    %v2052 = vadd.f32 %v2035, %v2048
    %v2053 = vadd.f32 %v2036, %v2048
    %v2054 = vadd.f32 %v2037, %v2048
    %v2055 = vadd.f32 %v2038, %v2048
    %v2056 = vadd.f32 %v2039, %v2048
    %v2057 = vadd.f32 %v2040, %v2048
    %v2058 = vadd.f32 %v2041, %v2048
    %v2059 = vadd.f32 %v2042, %v2048
    %v2060 = vxor.u32 %v2050, 2147483648
    %v2061 = vxor.u32 %v2051, 2147483648
    %v2062 = vxor.u32 %v2052, 2147483648
    %v2063 = vxor.u32 %v2053, 2147483648
    %v2064 = vxor.u32 %v2054, 2147483648
    %v2065 = vxor.u32 %v2055, 2147483648
    %v2066 = vxor.u32 %v2056, 2147483648
    %v2067 = vxor.u32 %v2057, 2147483648
    %v2068 = vxor.u32 %v2058, 2147483648
    %v2069 = vxor.u32 %v2059, 2147483648
    %v2070 = vmul.f32 %v2060, 1.442695
    %v2071 = vpow.pop %v2070
    %v2072 = vmul.f32 %v2061, 1.442695
    %v2073 = vpow.pop %v2072
    %v2074 = vmul.f32 %v2062, 1.442695
    %v2075 = vpow.pop %v2074
    %v2076 = vmul.f32 %v2063, 1.442695
    %v2077 = vpow.pop %v2076
    %v2078 = vmul.f32 %v2064, 1.442695
    %v2079 = vpow.pop %v2078
    %v2080 = vmul.f32 %v2065, 1.442695
    %v2081 = vpow.pop %v2080
    %v2082 = vmul.f32 %v2066, 1.442695
    %v2083 = vpow.pop %v2082
    %v2084 = vmul.f32 %v2067, 1.442695
    %v2085 = vpow.pop %v2084
    %v2086 = vmul.f32 %v2068, 1.442695
    %v2087 = vpow.pop %v2086
    %v2088 = vmul.f32 %v2069, 1.442695
    %v2089 = vpow.pop %v2088
    %v2090 = vadd.f32 %v2071, 1.0
    %v2091 = vadd.f32 %v2073, 1.0
    %v2092 = vadd.f32 %v2075, 1.0
    %v2093 = vadd.f32 %v2077, 1.0
    %v2094 = vadd.f32 %v2079, 1.0
    %v2095 = vadd.f32 %v2081, 1.0
    %v2096 = vadd.f32 %v2083, 1.0
    %v2097 = vadd.f32 %v2085, 1.0
    %v2098 = vadd.f32 %v2087, 1.0
    %v2099 = vadd.f32 %v2089, 1.0
    %v2100 = vrcp.pop %v2090
    %v2101 = vmul.f32 1.0, %v2100
    %v2102 = vrcp.pop %v2091
    %v2103 = vmul.f32 1.0, %v2102
    %v2104 = vrcp.pop %v2092
    %v2105 = vmul.f32 1.0, %v2104
    %v2106 = vrcp.pop %v2093
    %v2107 = vmul.f32 1.0, %v2106
    %v2108 = vrcp.pop %v2094
    %v2109 = vmul.f32 1.0, %v2108
    %v2110 = vrcp.pop %v2095
    %v2111 = vmul.f32 1.0, %v2110
    %v2112 = vrcp.pop %v2096
    %v2113 = vmul.f32 1.0, %v2112
    %v2114 = vrcp.pop %v2097
    %v2115 = vmul.f32 1.0, %v2114
    %v2116 = vrcp.pop %v2098
    %v2117 = vmul.f32 1.0, %v2116
    %v2118 = vrcp.pop %v2099
    %v2119 = vmul.f32 1.0, %v2118
    %vm2120 = vcmask 326656
    %2121 = vst.msk [vmem:[#allocation2] sm:$0xff] %vm2120, %v2101
    %2122 = vst.msk [vmem:[#allocation2 + $0x8] sm:$0xff] %vm2120, %v2103
    %2123 = vst.msk [vmem:[#allocation2 + $0x10] sm:$0xff] %vm2120, %v2105
    %2124 = vst.msk [vmem:[#allocation2 + $0x18] sm:$0xff] %vm2120, %v2107
    %2125 = vst.msk [vmem:[#allocation2 + $0x20] sm:$0xff] %vm2120, %v2109
    %2126 = vst.msk [vmem:[#allocation2 + $0x28] sm:$0xff] %vm2120, %v2111
    %2127 = vst.msk [vmem:[#allocation2 + $0x30] sm:$0xff] %vm2120, %v2113
    %2128 = vst.msk [vmem:[#allocation2 + $0x38] sm:$0xff] %vm2120, %v2115
    %2129 = vst.msk [vmem:[#allocation2 + $0x40] sm:$0xff] %vm2120, %v2117
    %2130 = vst.msk [vmem:[#allocation2 + $0x48] sm:$0xff] %vm2120, %v2119
    // Predicated region
    $region42: #{decoder_forward.1} parent=1 // pred_check
      _
    $region43: #{decoder_forward.1} parent=1 // pred_check_branch
      %2132 = sbr.rel (0) target = $region45
    $region44: #{decoder_forward.1} parent=1 // pred_region
      %s2134 = ssub.s32 1280, 1280
      %2135 = vsyncadd [#allocation3], %s2134
      %s2136 = sshll.u32 [#allocation2], 4
      %s2137 = int_to_ptr.vmem [resolvable:$true] %s2136
      %2142 = dma.vmem_to_hbm [thread:$0]  %s2137, 1280, %s10, [#allocation3], 128, 128, 8
    $region45: #{decoder_forward.1} parent=1 // pred_fallthru
      _
    // Predicated region
    $region46: #{decoder_forward.1} parent=1 // pred_check
      _
    $region47: #{decoder_forward.1} parent=1 // pred_check_branch
      %2144 = sbr.rel (0) target = $region49
    $region48: #{decoder_forward.1} parent=1 // pred_region
      %2145 = dma.done [#allocation3], 1280
    $region49: #{decoder_forward.1} parent=1 // pred_fallthru
      _
    %2146 = vsyncpa [#allocation3], 1

</llo_original>
